<compile_context>
chip_gen: v6e
topology: v6e:2x2x1
jax: 0.10.0
libtpu: 0.0.40
codegen_flags: <defaults>
</compile_context>

<pallas_src>
import jax
import jax.numpy as jnp
from jax.experimental import pallas as pl
from jax.experimental.pallas import tpu as pltpu


IN_FEATURES = 1000
HIDDEN = 512


def _round_up(x, m):
    return (x + m - 1) // m * m


def encoder_head_kernel(x_ref, w1_ref, b1_ref, w2_ref, b2_ref, o_ref):
    # layer1: (tb, K_p) @ (K_p, H) on the MXU, bf16 operands, f32 accumulation.
    h = jnp.dot(x_ref[...], w1_ref[...], preferred_element_type=jnp.float32)
    h = jnp.maximum(h + b1_ref[...], 0.0)          # bias + ReLU on the VPU (f32)
    # layer2: (tb, H) @ (H, L_p)
    y = jnp.dot(h.astype(jnp.bfloat16), w2_ref[...],
                preferred_element_type=jnp.float32)
    o_ref[...] = (y + b2_ref[...]).astype(o_ref.dtype)


def encoder_head(feats, w1_p, b1_p, w2_p, b2_p, *, latent_size, block_b=512):
    """Fused Linear(1000,512) -> ReLU -> Linear(512,latent) head.

    feats: (B, 1000) float (any dtype); weights are the pre-padded, lane-dense
    bf16 tensors from init_encoder_params:
      w1_p: (1024, 512) bf16, b1_p: (1, 512) f32,
      w2_p: (512, 128)  bf16, b2_p: (1, 128) f32.
    Returns (B, latent_size) float32.
    """
    B, K = feats.shape
    K_p, H_p = w1_p.shape          # 1024, 512 (already lane-dense)
    L_p = w2_p.shape[1]            # 128

    # Batch tiling: big tiles amortize per-step pipeline overhead, but keep >= 2
    # grid steps when B > 8 so v7x's two TensorCores both get work.
    tb_full = _round_up(B, 8)
    tb = min(block_b, tb_full)
    if B > 8:
        tb = min(tb, _round_up((B + 1) // 2, 8))
    B_p = _round_up(B, tb)
    grid = (B_p // tb,)

    # Single fused downcast + lane-dense zero pad (exact no-op for this head).
    x_p = jnp.pad(feats.astype(jnp.bfloat16), ((0, B_p - B), (0, K_p - K)))

    flops = 2 * B_p * K_p * H_p + 2 * B_p * H_p * L_p
    bytes_accessed = (x_p.size * 2            # bf16 activations
                      + w1_p.size * 2 + w2_p.size * 2   # bf16 weights
                      + b1_p.size * 4 + b2_p.size * 4   # f32 biases
                      + B_p * L_p * 4)                  # f32 output

    out_p = pl.pallas_call(
        encoder_head_kernel,
        out_shape=jax.ShapeDtypeStruct((B_p, L_p), jnp.float32),
        grid=grid,
        in_specs=[
            pl.BlockSpec((tb, K_p), lambda i: (i, 0)),    # activations: tiled over B
            pl.BlockSpec((K_p, H_p), lambda i: (0, 0)),   # W1: VMEM-resident
            pl.BlockSpec((1, H_p), lambda i: (0, 0)),     # b1
            pl.BlockSpec((H_p, L_p), lambda i: (0, 0)),   # W2: VMEM-resident
            pl.BlockSpec((1, L_p), lambda i: (0, 0)),     # b2
        ],
        out_specs=pl.BlockSpec((tb, L_p), lambda i: (i, 0)),
        compiler_params=pltpu.CompilerParams(
            # Independent batch tiles -> shard across TensorCores on v7x megacore.
            dimension_semantics=("parallel",),
        ),
        cost_estimate=pl.CostEstimate(
            flops=flops, transcendentals=0, bytes_accessed=bytes_accessed),
    )(x_p, w1_p, b1_p, w2_p, b2_p)

    return out_p[:B, :latent_size]


def init_encoder_params(key, latent_size):
    """torch.nn.Linear-style init (uniform +/- 1/sqrt(fan_in)).

    Weights are returned pre-transposed to (in, out), cast to bf16, and
    zero-padded ONCE to lane-dense shapes (K: 1000->1024, latent->128) so the
    per-call wrapper never touches them again. Biases are kept f32 (padded).
    """
    k1, k2, k3, k4 = jax.random.split(key, 4)
    in1, out1 = IN_FEATURES, HIDDEN
    in2, out2 = HIDDEN, latent_size
    lim1 = 1.0 / jnp.sqrt(jnp.float32(in1))
    lim2 = 1.0 / jnp.sqrt(jnp.float32(in2))
    w1 = jax.random.uniform(k1, (in1, out1), jnp.float32, -lim1, lim1)
    b1 = jax.random.uniform(k2, (1, out1), jnp.float32, -lim1, lim1)
    w2 = jax.random.uniform(k3, (in2, out2), jnp.float32, -lim2, lim2)
    b2 = jax.random.uniform(k4, (1, out2), jnp.float32, -lim2, lim2)

    K_p = _round_up(in1, 128)      # 1000 -> 1024
    H_p = _round_up(out1, 128)     # 512  -> 512
    L_p = _round_up(out2, 128)     # latent -> 128

    w1_p = jnp.pad(w1, ((0, K_p - in1), (0, H_p - out1))).astype(jnp.bfloat16)
    b1_p = jnp.pad(b1, ((0, 0), (0, H_p - out1)))
    w2_p = jnp.pad(w2, ((0, H_p - in2), (0, L_p - out2))).astype(jnp.bfloat16)
    b2_p = jnp.pad(b2, ((0, 0), (0, L_p - out2)))
    return w1_p, b1_p, w2_p, b2_p


if __name__ == "__main__":
    latent_size = 32
    B = 2

    key = jax.random.PRNGKey(0)
    k_feat, k_param = jax.random.split(key)

    # Backbone features standing in for resnet50(x) output: (B, 1000).
    feats = jax.random.normal(k_feat, (B, IN_FEATURES), dtype=jnp.float32)
    w1_p, b1_p, w2_p, b2_p = init_encoder_params(k_param, latent_size)

    out = encoder_head(feats, w1_p, b1_p, w2_p, b2_p, latent_size=latent_size)
    out = jax.block_until_ready(out)

    # Reference in plain JAX with the same bf16 rounding / f32 accumulation,
    # using the unpadded views of the pre-padded parameters.
    w1f = w1_p[:IN_FEATURES, :HIDDEN].astype(jnp.float32)
    b1f = b1_p[:, :HIDDEN]
    w2f = w2_p[:HIDDEN, :latent_size].astype(jnp.float32)
    b2f = b2_p[:, :latent_size]
    xr = feats.astype(jnp.bfloat16).astype(jnp.float32)
    h = jnp.maximum(xr @ w1f + b1f, 0.0)
    hr = h.astype(jnp.bfloat16).astype(jnp.float32)
    ref = hr @ w2f + b2f

    assert out.shape == (B, latent_size)
    assert out.dtype == jnp.float32
    assert jnp.allclose(out, ref, atol=2e-2, rtol=2e-2), "mismatch vs reference"

    print("KERNEL_OK")
</pallas_src>

<mosaic_0001>
module attributes {stable_mosaic.version = 11 : i64} {
  func.func @encoder_head_kernel(%arg0: i32, %arg1: memref<8x1024xbf16, #tpu.memory_space<vmem>>, %arg2: memref<1024x512xbf16, #tpu.memory_space<vmem>>, %arg3: memref<1x512xf32, #tpu.memory_space<vmem>>, %arg4: memref<512x128xbf16, #tpu.memory_space<vmem>>, %arg5: memref<1x128xf32, #tpu.memory_space<vmem>>, %arg6: memref<8x128xf32, #tpu.memory_space<vmem>>) attributes {dimension_semantics = [#tpu.dimension_semantics<parallel>], iteration_bounds = array<i64: 1>, scalar_prefetch = 0 : i64, scratch_operands = 0 : i64, tpu.core_type = #tpu.core_type<tc>, window_params = [{transform_indices = @transform_0, window_bounds = array<i64: 8, 1024>}, {pipeline_mode = #tpu.pipeline_mode<synchronous>, transform_indices = @transform_1, window_bounds = array<i64: 1024, 512>}, {pipeline_mode = #tpu.pipeline_mode<synchronous>, transform_indices = @transform_2, window_bounds = array<i64: 1, 512>}, {pipeline_mode = #tpu.pipeline_mode<synchronous>, transform_indices = @transform_3, window_bounds = array<i64: 512, 128>}, {pipeline_mode = #tpu.pipeline_mode<synchronous>, transform_indices = @transform_4, window_bounds = array<i64: 1, 128>}, {transform_indices = @transform_5, window_bounds = array<i64: 8, 128>}]} {
    %c0 = arith.constant 0 : index
    %c0_0 = arith.constant 0 : index
    %0 = vector.load %arg1[%c0, %c0_0] : memref<8x1024xbf16, #tpu.memory_space<vmem>>, vector<8x1024xbf16>
    %c0_1 = arith.constant 0 : index
    %c0_2 = arith.constant 0 : index
    %1 = vector.load %arg2[%c0_1, %c0_2] : memref<1024x512xbf16, #tpu.memory_space<vmem>>, vector<1024x512xbf16>
    %cst = arith.constant dense<0.000000e+00> : vector<8x512xf32>
    %2 = tpu.matmul %0, %1, %cst {dimension_numbers = #tpu.dot_dimension_numbers<[1], [0], [0], [1], [0, 0, 1, 1], [], []>} : vector<8x1024xbf16>, vector<1024x512xbf16>, vector<8x512xf32> -> vector<8x512xf32>
    %c0_3 = arith.constant 0 : index
    %c0_4 = arith.constant 0 : index
    %3 = vector.load %arg3[%c0_3, %c0_4] : memref<1x512xf32, #tpu.memory_space<vmem>>, vector<1x512xf32>
    %4 = vector.broadcast %3 : vector<1x512xf32> to vector<8x512xf32>
    %5 = arith.addf %2, %4 : vector<8x512xf32>
    %cst_5 = arith.constant 0.000000e+00 : f32
    %6 = vector.broadcast %cst_5 : f32 to vector<8x512xf32>
    %7 = arith.maximumf %5, %6 : vector<8x512xf32>
    %8 = arith.truncf %7 : vector<8x512xf32> to vector<8x512xbf16>
    %c0_6 = arith.constant 0 : index
    %c0_7 = arith.constant 0 : index
    %9 = vector.load %arg4[%c0_6, %c0_7] : memref<512x128xbf16, #tpu.memory_space<vmem>>, vector<512x128xbf16>
    %cst_8 = arith.constant dense<0.000000e+00> : vector<8x128xf32>
    %10 = tpu.matmul %8, %9, %cst_8 {dimension_numbers = #tpu.dot_dimension_numbers<[1], [0], [0], [1], [0, 0, 1, 1], [], []>} : vector<8x512xbf16>, vector<512x128xbf16>, vector<8x128xf32> -> vector<8x128xf32>
    %c0_9 = arith.constant 0 : index
    %c0_10 = arith.constant 0 : index
    %11 = vector.load %arg5[%c0_9, %c0_10] : memref<1x128xf32, #tpu.memory_space<vmem>>, vector<1x128xf32>
    %12 = vector.broadcast %11 : vector<1x128xf32> to vector<8x128xf32>
    %13 = arith.addf %10, %12 : vector<8x128xf32>
    %c0_11 = arith.constant 0 : index
    %c0_12 = arith.constant 0 : index
    %14 = vector.load %arg6[%c0_11, %c0_12] : memref<8x128xf32, #tpu.memory_space<vmem>>, vector<8x128xf32>
    tpu.vector_store %arg6[%c0_11, %c0_12], %13 {strides = array<i32>} : memref<8x128xf32, #tpu.memory_space<vmem>>, vector<8x128xf32>,
    return
  }
  func.func @transform_0(%arg0: i32) -> (i32, i32) {
    %c0_i32 = arith.constant 0 : i32
    %c0_i32_0 = arith.constant 0 : i32
    return %arg0, %c0_i32 : i32, i32
  }
  func.func @transform_1(%arg0: i32) -> (i32, i32) {
    %c0_i32 = arith.constant 0 : i32
    %c0_i32_0 = arith.constant 0 : i32
    %c0_i32_1 = arith.constant 0 : i32
    return %c0_i32, %c0_i32_0 : i32, i32
  }
  func.func @transform_2(%arg0: i32) -> (i32, i32) {
    %c0_i32 = arith.constant 0 : i32
    %c0_i32_0 = arith.constant 0 : i32
    %c0_i32_1 = arith.constant 0 : i32
    return %c0_i32, %c0_i32_0 : i32, i32
  }
  func.func @transform_3(%arg0: i32) -> (i32, i32) {
    %c0_i32 = arith.constant 0 : i32
    %c0_i32_0 = arith.constant 0 : i32
    %c0_i32_1 = arith.constant 0 : i32
    return %c0_i32, %c0_i32_0 : i32, i32
  }
  func.func @transform_4(%arg0: i32) -> (i32, i32) {
    %c0_i32 = arith.constant 0 : i32
    %c0_i32_0 = arith.constant 0 : i32
    %c0_i32_1 = arith.constant 0 : i32
    return %c0_i32, %c0_i32_0 : i32, i32
  }
  func.func @transform_5(%arg0: i32) -> (i32, i32) {
    %c0_i32 = arith.constant 0 : i32
    %c0_i32_0 = arith.constant 0 : i32
    return %arg0, %c0_i32 : i32, i32
  }
}

</mosaic_0001>

<llo_original>
// kernel: tpu_custom_call.1
$region0: #{tpu_custom_call.1}
  #allocation0 [shape = 'u32[]', space=smem, size = 0x4, offset = 0x4, fixed_abs, tag = 'smem constant byte address 0x4 - core index']
  #allocation1 [shape = 'u32[144,128]{1,0:T(1,128)}', space=vmem, size = 0x12000, scoped, tag = 'internal scratch']
  %s0 = inlined_call_operand.hbm [shape: bf16[8,1024], index: 0, kind: input, shape index: {}]
  %s1 = inlined_call_operand.hbm [shape: bf16[1024,512], index: 1, kind: input, shape index: {}]
  %s2 = inlined_call_operand.hbm [shape: f32[1,512], index: 2, kind: input, shape index: {}]
  %s3 = inlined_call_operand.hbm [shape: bf16[512,128], index: 3, kind: input, shape index: {}]
  %s4 = inlined_call_operand.vmem [shape: f32[1,128], index: 4, kind: input, shape index: {}]
  %s5 = inlined_call_operand.hbm [shape: f32[8,128], index: 5, kind: output, shape index: {}]
  %s6 = sld [smem:[#allocation0]]
  $region46: #{tpu_custom_call.1} parent=0
    _
  %s8 = ssub.s32 1, %s6
  %s9 = scalar_select 0, %s8, %s6
  $region1: #{tpu_custom_call.1} parent=0
    #allocation2 [shape = 'u8[16384]{0}', space=vmem, size = 0x4000, scoped, tag = 'input window, operand 0, single buffered']
    #allocation3 [shape = 's32[1]{0}', space=sflag, size = 0x4, scoped, tag = 'scoped memory for tpu_custom_call.1']
    #allocation4 [shape = 's32[1]{0}', space=sflag, size = 0x4, scoped, tag = 'scoped memory for tpu_custom_call.1']
    #allocation5 [shape = 'u8[1048576]{0}', space=vmem, size = 0x100000, scoped, tag = 'input window, operand 1, single buffered']
    #allocation6 [shape = 's32[1]{0}', space=sflag, size = 0x4, scoped, tag = 'scoped memory for tpu_custom_call.1']
    #allocation7 [shape = 'u8[2048]{0}', space=vmem, size = 0x800, scoped, tag = 'input window, operand 2, single buffered']
    #allocation8 [shape = 'u8[131072]{0}', space=vmem, size = 0x20000, scoped, tag = 'input window, operand 3, single buffered']
    #allocation9 [shape = 's32[1]{0}', space=sflag, size = 0x4, scoped, tag = 'scoped memory for tpu_custom_call.1']
    #allocation10 [shape = 'u8[4096]{0}', space=vmem, size = 0x1000, scoped, tag = 'output window, operand 0, single buffered']
    %10 = vsyncpa [#allocation3], 0
    %11 = vsyncpa [#allocation6], 0
    %12 = vsyncpa [#allocation9], 0
    %13 = vsyncpa [#allocation4], 0
    // Predicated region
    $region2: #{tpu_custom_call.1} parent=1 // pred_check
      _
    $region3: #{tpu_custom_call.1} parent=1 // pred_check_branch
      %15 = sbr.rel (0) target = $region5
    $region4: #{tpu_custom_call.1} parent=1 // pred_region
      %s17 = ssub.s32 512, 512
      %18 = vsyncadd [#allocation3], %s17
      %s20 = sshll.u32 [#allocation2], 4
      %s21 = int_to_ptr.vmem [resolvable:$true] %s20
      %23 = dma.hbm_to_vmem [thread:$0]  %s0, 512, %s21, [#allocation3]
    $region5: #{tpu_custom_call.1} parent=1 // pred_fallthru
      _
    // Predicated region
    $region6: #{tpu_custom_call.1} parent=1 // pred_check
      _
    $region7: #{tpu_custom_call.1} parent=1 // pred_check_branch
      %25 = sbr.rel (0) target = $region9
    $region8: #{tpu_custom_call.1} parent=1 // pred_region
      %s27 = ssub.s32 32768, 32768
      %28 = vsyncadd [#allocation6], %s27
      %s29 = sshll.u32 [#allocation5], 4
      %s30 = int_to_ptr.vmem [resolvable:$true] %s29
      %35 = dma.hbm_to_vmem [thread:$0]  %s1, 32768, %s30, [#allocation6], 256, 256, 16
    $region9: #{tpu_custom_call.1} parent=1 // pred_fallthru
      _
    // Predicated region
    $region10: #{tpu_custom_call.1} parent=1 // pred_check
      _
    $region11: #{tpu_custom_call.1} parent=1 // pred_check_branch
      %37 = sbr.rel (0) target = $region13
    $region12: #{tpu_custom_call.1} parent=1 // pred_region
      %s39 = ssub.s32 64, 64
      %40 = vsyncadd [#allocation6], %s39
      %s42 = sshll.u32 [#allocation7], 4
      %s43 = int_to_ptr.vmem [resolvable:$true] %s42
      %45 = dma.hbm_to_vmem [thread:$0]  %s2, 64, %s43, [#allocation6]
    $region13: #{tpu_custom_call.1} parent=1 // pred_fallthru
      _
    // Predicated region
    $region14: #{tpu_custom_call.1} parent=1 // pred_check
      _
    $region15: #{tpu_custom_call.1} parent=1 // pred_check_branch
      %47 = sbr.rel (0) target = $region17
    $region16: #{tpu_custom_call.1} parent=1 // pred_region
      %s49 = ssub.s32 4096, 4096
      %50 = vsyncadd [#allocation9], %s49
      %s51 = sshll.u32 [#allocation8], 4
      %s52 = int_to_ptr.vmem [resolvable:$true] %s51
      %57 = dma.hbm_to_vmem [thread:$0]  %s3, 4096, %s52, [#allocation9], 64, 64, 4
    $region17: #{tpu_custom_call.1} parent=1 // pred_fallthru
      _
    // Predicated region
    $region18: #{tpu_custom_call.1} parent=1 // pred_check
      _
    $region19: #{tpu_custom_call.1} parent=1 // pred_check_branch
      %59 = sbr.rel (0) target = $region21
    $region20: #{tpu_custom_call.1} parent=1 // pred_region
      _
    $region21: #{tpu_custom_call.1} parent=1 // pred_fallthru
      _
    // Predicated region
    $region22: #{tpu_custom_call.1} parent=1 // pred_check
      _
    $region23: #{tpu_custom_call.1} parent=1 // pred_check_branch
      %61 = sbr.rel (0) target = $region25
    $region24: #{tpu_custom_call.1} parent=1 // pred_region
      %62 = dma.done [#allocation3], 512
    $region25: #{tpu_custom_call.1} parent=1 // pred_fallthru
      _
    // Predicated region
    $region26: #{tpu_custom_call.1} parent=1 // pred_check
      _
    $region27: #{tpu_custom_call.1} parent=1 // pred_check_branch
      %64 = sbr.rel (0) target = $region29
    $region28: #{tpu_custom_call.1} parent=1 // pred_region
      %65 = dma.done [#allocation6], 32768
    $region29: #{tpu_custom_call.1} parent=1 // pred_fallthru
      _
    // Predicated region
    $region30: #{tpu_custom_call.1} parent=1 // pred_check
      _
    $region31: #{tpu_custom_call.1} parent=1 // pred_check_branch
      %67 = sbr.rel (0) target = $region33
    $region32: #{tpu_custom_call.1} parent=1 // pred_region
      %68 = dma.done [#allocation6], 64
    $region33: #{tpu_custom_call.1} parent=1 // pred_fallthru
      _
    // Predicated region
    $region34: #{tpu_custom_call.1} parent=1 // pred_check
      _
    $region35: #{tpu_custom_call.1} parent=1 // pred_check_branch
      %70 = sbr.rel (0) target = $region37
    $region36: #{tpu_custom_call.1} parent=1 // pred_region
      %71 = dma.done [#allocation9], 4096
    $region37: #{tpu_custom_call.1} parent=1 // pred_fallthru
      _
    %v73 = vld [vmem:[#allocation2] sm:$0xff]
    %v74 = vld [vmem:[#allocation2 + $0x8] sm:$0xff]
    %v75 = vld [vmem:[#allocation2 + $0x10] sm:$0xff]
    %v76 = vld [vmem:[#allocation2 + $0x18] sm:$0xff]
    %v77 = vld [vmem:[#allocation5] sm:$0xff]
    %v78 = vld [vmem:[#allocation5 + $0x8] sm:$0xff]
    %v79 = vld [vmem:[#allocation5 + $0x10] sm:$0xff]
    %v80 = vld [vmem:[#allocation5 + $0x18] sm:$0xff]
    %v81 = vld [vmem:[#allocation5 + $0x20] sm:$0xff]
    %v82 = vld [vmem:[#allocation5 + $0x28] sm:$0xff]
    %v83 = vld [vmem:[#allocation5 + $0x30] sm:$0xff]
    %v84 = vld [vmem:[#allocation5 + $0x38] sm:$0xff]
    %v85 = vld [vmem:[#allocation5 + $0x40] sm:$0xff]
    %v86 = vld [vmem:[#allocation5 + $0x48] sm:$0xff]
    %v87 = vld [vmem:[#allocation5 + $0x50] sm:$0xff]
    %v88 = vld [vmem:[#allocation5 + $0x58] sm:$0xff]
    %v89 = vld [vmem:[#allocation5 + $0x60] sm:$0xff]
    %v90 = vld [vmem:[#allocation5 + $0x68] sm:$0xff]
    %v91 = vld [vmem:[#allocation5 + $0x70] sm:$0xff]
    %v92 = vld [vmem:[#allocation5 + $0x78] sm:$0xff]
    %v93 = vld [vmem:[#allocation5 + $0x80] sm:$0xff]
    %v94 = vld [vmem:[#allocation5 + $0x88] sm:$0xff]
    %v95 = vld [vmem:[#allocation5 + $0x90] sm:$0xff]
    %v96 = vld [vmem:[#allocation5 + $0x98] sm:$0xff]
    %v97 = vld [vmem:[#allocation5 + $0xa0] sm:$0xff]
    %v98 = vld [vmem:[#allocation5 + $0xa8] sm:$0xff]
    %v99 = vld [vmem:[#allocation5 + $0xb0] sm:$0xff]
    %v100 = vld [vmem:[#allocation5 + $0xb8] sm:$0xff]
    %v101 = vld [vmem:[#allocation5 + $0xc0] sm:$0xff]
    %v102 = vld [vmem:[#allocation5 + $0xc8] sm:$0xff]
    %v103 = vld [vmem:[#allocation5 + $0xd0] sm:$0xff]
    %v104 = vld [vmem:[#allocation5 + $0xd8] sm:$0xff]
    %v105 = vld [vmem:[#allocation5 + $0xe0] sm:$0xff]
    %v106 = vld [vmem:[#allocation5 + $0xe8] sm:$0xff]
    %v107 = vld [vmem:[#allocation5 + $0xf0] sm:$0xff]
    %v108 = vld [vmem:[#allocation5 + $0xf8] sm:$0xff]
    %v109 = vld [vmem:[#allocation5 + $0x100] sm:$0xff]
    %v110 = vld [vmem:[#allocation5 + $0x108] sm:$0xff]
    %v111 = vld [vmem:[#allocation5 + $0x110] sm:$0xff]
    %v112 = vld [vmem:[#allocation5 + $0x118] sm:$0xff]
    %v113 = vld [vmem:[#allocation5 + $0x120] sm:$0xff]
    %v114 = vld [vmem:[#allocation5 + $0x128] sm:$0xff]
    %v115 = vld [vmem:[#allocation5 + $0x130] sm:$0xff]
    %v116 = vld [vmem:[#allocation5 + $0x138] sm:$0xff]
    %v117 = vld [vmem:[#allocation5 + $0x140] sm:$0xff]
    %v118 = vld [vmem:[#allocation5 + $0x148] sm:$0xff]
    %v119 = vld [vmem:[#allocation5 + $0x150] sm:$0xff]
    %v120 = vld [vmem:[#allocation5 + $0x158] sm:$0xff]
    %v121 = vld [vmem:[#allocation5 + $0x160] sm:$0xff]
    %v122 = vld [vmem:[#allocation5 + $0x168] sm:$0xff]
    %v123 = vld [vmem:[#allocation5 + $0x170] sm:$0xff]
    %v124 = vld [vmem:[#allocation5 + $0x178] sm:$0xff]
    %v125 = vld [vmem:[#allocation5 + $0x180] sm:$0xff]
    %v126 = vld [vmem:[#allocation5 + $0x188] sm:$0xff]
    %v127 = vld [vmem:[#allocation5 + $0x190] sm:$0xff]
    %v128 = vld [vmem:[#allocation5 + $0x198] sm:$0xff]
    %v129 = vld [vmem:[#allocation5 + $0x1a0] sm:$0xff]
    %v130 = vld [vmem:[#allocation5 + $0x1a8] sm:$0xff]
    %v131 = vld [vmem:[#allocation5 + $0x1b0] sm:$0xff]
    %v132 = vld [vmem:[#allocation5 + $0x1b8] sm:$0xff]
    %v133 = vld [vmem:[#allocation5 + $0x1c0] sm:$0xff]
    %v134 = vld [vmem:[#allocation5 + $0x1c8] sm:$0xff]
    %v135 = vld [vmem:[#allocation5 + $0x1d0] sm:$0xff]
    %v136 = vld [vmem:[#allocation5 + $0x1d8] sm:$0xff]
    %v137 = vld [vmem:[#allocation5 + $0x1e0] sm:$0xff]
    %v138 = vld [vmem:[#allocation5 + $0x1e8] sm:$0xff]
    %v139 = vld [vmem:[#allocation5 + $0x1f0] sm:$0xff]
    %v140 = vld [vmem:[#allocation5 + $0x1f8] sm:$0xff]
    %v141 = vld [vmem:[#allocation5 + $0x200] sm:$0xff]
    %v142 = vld [vmem:[#allocation5 + $0x208] sm:$0xff]
    %v143 = vld [vmem:[#allocation5 + $0x210] sm:$0xff]
    %v144 = vld [vmem:[#allocation5 + $0x218] sm:$0xff]
    %v145 = vld [vmem:[#allocation5 + $0x220] sm:$0xff]
    %v146 = vld [vmem:[#allocation5 + $0x228] sm:$0xff]
    %v147 = vld [vmem:[#allocation5 + $0x230] sm:$0xff]
    %v148 = vld [vmem:[#allocation5 + $0x238] sm:$0xff]
    %v149 = vld [vmem:[#allocation5 + $0x240] sm:$0xff]
    %v150 = vld [vmem:[#allocation5 + $0x248] sm:$0xff]
    %v151 = vld [vmem:[#allocation5 + $0x250] sm:$0xff]
    %v152 = vld [vmem:[#allocation5 + $0x258] sm:$0xff]
    %v153 = vld [vmem:[#allocation5 + $0x260] sm:$0xff]
    %v154 = vld [vmem:[#allocation5 + $0x268] sm:$0xff]
    %v155 = vld [vmem:[#allocation5 + $0x270] sm:$0xff]
    %v156 = vld [vmem:[#allocation5 + $0x278] sm:$0xff]
    %v157 = vld [vmem:[#allocation5 + $0x280] sm:$0xff]
    %v158 = vld [vmem:[#allocation5 + $0x288] sm:$0xff]
    %v159 = vld [vmem:[#allocation5 + $0x290] sm:$0xff]
    %v160 = vld [vmem:[#allocation5 + $0x298] sm:$0xff]
    %v161 = vld [vmem:[#allocation5 + $0x2a0] sm:$0xff]
    %v162 = vld [vmem:[#allocation5 + $0x2a8] sm:$0xff]
    %v163 = vld [vmem:[#allocation5 + $0x2b0] sm:$0xff]
    %v164 = vld [vmem:[#allocation5 + $0x2b8] sm:$0xff]
    %v165 = vld [vmem:[#allocation5 + $0x2c0] sm:$0xff]
    %v166 = vld [vmem:[#allocation5 + $0x2c8] sm:$0xff]
    %v167 = vld [vmem:[#allocation5 + $0x2d0] sm:$0xff]
    %v168 = vld [vmem:[#allocation5 + $0x2d8] sm:$0xff]
    %v169 = vld [vmem:[#allocation5 + $0x2e0] sm:$0xff]
    %v170 = vld [vmem:[#allocation5 + $0x2e8] sm:$0xff]
    %v171 = vld [vmem:[#allocation5 + $0x2f0] sm:$0xff]
    %v172 = vld [vmem:[#allocation5 + $0x2f8] sm:$0xff]
    %v173 = vld [vmem:[#allocation5 + $0x300] sm:$0xff]
    %v174 = vld [vmem:[#allocation5 + $0x308] sm:$0xff]
    %v175 = vld [vmem:[#allocation5 + $0x310] sm:$0xff]
    %v176 = vld [vmem:[#allocation5 + $0x318] sm:$0xff]
    %v177 = vld [vmem:[#allocation5 + $0x320] sm:$0xff]
    %v178 = vld [vmem:[#allocation5 + $0x328] sm:$0xff]
    %v179 = vld [vmem:[#allocation5 + $0x330] sm:$0xff]
    %v180 = vld [vmem:[#allocation5 + $0x338] sm:$0xff]
    %v181 = vld [vmem:[#allocation5 + $0x340] sm:$0xff]
    %v182 = vld [vmem:[#allocation5 + $0x348] sm:$0xff]
    %v183 = vld [vmem:[#allocation5 + $0x350] sm:$0xff]
    %v184 = vld [vmem:[#allocation5 + $0x358] sm:$0xff]
    %v185 = vld [vmem:[#allocation5 + $0x360] sm:$0xff]
    %v186 = vld [vmem:[#allocation5 + $0x368] sm:$0xff]
    %v187 = vld [vmem:[#allocation5 + $0x370] sm:$0xff]
    %v188 = vld [vmem:[#allocation5 + $0x378] sm:$0xff]
    %v189 = vld [vmem:[#allocation5 + $0x380] sm:$0xff]
    %v190 = vld [vmem:[#allocation5 + $0x388] sm:$0xff]
    %v191 = vld [vmem:[#allocation5 + $0x390] sm:$0xff]
    %v192 = vld [vmem:[#allocation5 + $0x398] sm:$0xff]
    %v193 = vld [vmem:[#allocation5 + $0x3a0] sm:$0xff]
    %v194 = vld [vmem:[#allocation5 + $0x3a8] sm:$0xff]
    %v195 = vld [vmem:[#allocation5 + $0x3b0] sm:$0xff]
    %v196 = vld [vmem:[#allocation5 + $0x3b8] sm:$0xff]
    %v197 = vld [vmem:[#allocation5 + $0x3c0] sm:$0xff]
    %v198 = vld [vmem:[#allocation5 + $0x3c8] sm:$0xff]
    %v199 = vld [vmem:[#allocation5 + $0x3d0] sm:$0xff]
    %v200 = vld [vmem:[#allocation5 + $0x3d8] sm:$0xff]
    %v201 = vld [vmem:[#allocation5 + $0x3e0] sm:$0xff]
    %v202 = vld [vmem:[#allocation5 + $0x3e8] sm:$0xff]
    %v203 = vld [vmem:[#allocation5 + $0x3f0] sm:$0xff]
    %v204 = vld [vmem:[#allocation5 + $0x3f8] sm:$0xff]
    %v205 = vld [vmem:[#allocation5 + $0x400] sm:$0xff]
    %v206 = vld [vmem:[#allocation5 + $0x408] sm:$0xff]
    %v207 = vld [vmem:[#allocation5 + $0x410] sm:$0xff]
    %v208 = vld [vmem:[#allocation5 + $0x418] sm:$0xff]
    %v209 = vld [vmem:[#allocation5 + $0x420] sm:$0xff]
    %v210 = vld [vmem:[#allocation5 + $0x428] sm:$0xff]
    %v211 = vld [vmem:[#allocation5 + $0x430] sm:$0xff]
    %v212 = vld [vmem:[#allocation5 + $0x438] sm:$0xff]
    %v213 = vld [vmem:[#allocation5 + $0x440] sm:$0xff]
    %v214 = vld [vmem:[#allocation5 + $0x448] sm:$0xff]
    %v215 = vld [vmem:[#allocation5 + $0x450] sm:$0xff]
    %v216 = vld [vmem:[#allocation5 + $0x458] sm:$0xff]
    %v217 = vld [vmem:[#allocation5 + $0x460] sm:$0xff]
    %v218 = vld [vmem:[#allocation5 + $0x468] sm:$0xff]
    %v219 = vld [vmem:[#allocation5 + $0x470] sm:$0xff]
    %v220 = vld [vmem:[#allocation5 + $0x478] sm:$0xff]
    %v221 = vld [vmem:[#allocation5 + $0x480] sm:$0xff]
    %v222 = vld [vmem:[#allocation5 + $0x488] sm:$0xff]
    %v223 = vld [vmem:[#allocation5 + $0x490] sm:$0xff]
    %v224 = vld [vmem:[#allocation5 + $0x498] sm:$0xff]
    %v225 = vld [vmem:[#allocation5 + $0x4a0] sm:$0xff]
    %v226 = vld [vmem:[#allocation5 + $0x4a8] sm:$0xff]
    %v227 = vld [vmem:[#allocation5 + $0x4b0] sm:$0xff]
    %v228 = vld [vmem:[#allocation5 + $0x4b8] sm:$0xff]
    %v229 = vld [vmem:[#allocation5 + $0x4c0] sm:$0xff]
    %v230 = vld [vmem:[#allocation5 + $0x4c8] sm:$0xff]
    %v231 = vld [vmem:[#allocation5 + $0x4d0] sm:$0xff]
    %v232 = vld [vmem:[#allocation5 + $0x4d8] sm:$0xff]
    %v233 = vld [vmem:[#allocation5 + $0x4e0] sm:$0xff]
    %v234 = vld [vmem:[#allocation5 + $0x4e8] sm:$0xff]
    %v235 = vld [vmem:[#allocation5 + $0x4f0] sm:$0xff]
    %v236 = vld [vmem:[#allocation5 + $0x4f8] sm:$0xff]
    %v237 = vld [vmem:[#allocation5 + $0x500] sm:$0xff]
    %v238 = vld [vmem:[#allocation5 + $0x508] sm:$0xff]
    %v239 = vld [vmem:[#allocation5 + $0x510] sm:$0xff]
    %v240 = vld [vmem:[#allocation5 + $0x518] sm:$0xff]
    %v241 = vld [vmem:[#allocation5 + $0x520] sm:$0xff]
    %v242 = vld [vmem:[#allocation5 + $0x528] sm:$0xff]
    %v243 = vld [vmem:[#allocation5 + $0x530] sm:$0xff]
    %v244 = vld [vmem:[#allocation5 + $0x538] sm:$0xff]
    %v245 = vld [vmem:[#allocation5 + $0x540] sm:$0xff]
    %v246 = vld [vmem:[#allocation5 + $0x548] sm:$0xff]
    %v247 = vld [vmem:[#allocation5 + $0x550] sm:$0xff]
    %v248 = vld [vmem:[#allocation5 + $0x558] sm:$0xff]
    %v249 = vld [vmem:[#allocation5 + $0x560] sm:$0xff]
    %v250 = vld [vmem:[#allocation5 + $0x568] sm:$0xff]
    %v251 = vld [vmem:[#allocation5 + $0x570] sm:$0xff]
    %v252 = vld [vmem:[#allocation5 + $0x578] sm:$0xff]
    %v253 = vld [vmem:[#allocation5 + $0x580] sm:$0xff]
    %v254 = vld [vmem:[#allocation5 + $0x588] sm:$0xff]
    %v255 = vld [vmem:[#allocation5 + $0x590] sm:$0xff]
    %v256 = vld [vmem:[#allocation5 + $0x598] sm:$0xff]
    %v257 = vld [vmem:[#allocation5 + $0x5a0] sm:$0xff]
    %v258 = vld [vmem:[#allocation5 + $0x5a8] sm:$0xff]
    %v259 = vld [vmem:[#allocation5 + $0x5b0] sm:$0xff]
    %v260 = vld [vmem:[#allocation5 + $0x5b8] sm:$0xff]
    %v261 = vld [vmem:[#allocation5 + $0x5c0] sm:$0xff]
    %v262 = vld [vmem:[#allocation5 + $0x5c8] sm:$0xff]
    %v263 = vld [vmem:[#allocation5 + $0x5d0] sm:$0xff]
    %v264 = vld [vmem:[#allocation5 + $0x5d8] sm:$0xff]
    %v265 = vld [vmem:[#allocation5 + $0x5e0] sm:$0xff]
    %v266 = vld [vmem:[#allocation5 + $0x5e8] sm:$0xff]
    %v267 = vld [vmem:[#allocation5 + $0x5f0] sm:$0xff]
    %v268 = vld [vmem:[#allocation5 + $0x5f8] sm:$0xff]
    %v269 = vld [vmem:[#allocation5 + $0x600] sm:$0xff]
    %v270 = vld [vmem:[#allocation5 + $0x608] sm:$0xff]
    %v271 = vld [vmem:[#allocation5 + $0x610] sm:$0xff]
    %v272 = vld [vmem:[#allocation5 + $0x618] sm:$0xff]
    %v273 = vld [vmem:[#allocation5 + $0x620] sm:$0xff]
    %v274 = vld [vmem:[#allocation5 + $0x628] sm:$0xff]
    %v275 = vld [vmem:[#allocation5 + $0x630] sm:$0xff]
    %v276 = vld [vmem:[#allocation5 + $0x638] sm:$0xff]
    %v277 = vld [vmem:[#allocation5 + $0x640] sm:$0xff]
    %v278 = vld [vmem:[#allocation5 + $0x648] sm:$0xff]
    %v279 = vld [vmem:[#allocation5 + $0x650] sm:$0xff]
    %v280 = vld [vmem:[#allocation5 + $0x658] sm:$0xff]
    %v281 = vld [vmem:[#allocation5 + $0x660] sm:$0xff]
    %v282 = vld [vmem:[#allocation5 + $0x668] sm:$0xff]
    %v283 = vld [vmem:[#allocation5 + $0x670] sm:$0xff]
    %v284 = vld [vmem:[#allocation5 + $0x678] sm:$0xff]
    %v285 = vld [vmem:[#allocation5 + $0x680] sm:$0xff]
    %v286 = vld [vmem:[#allocation5 + $0x688] sm:$0xff]
    %v287 = vld [vmem:[#allocation5 + $0x690] sm:$0xff]
    %v288 = vld [vmem:[#allocation5 + $0x698] sm:$0xff]
    %v289 = vld [vmem:[#allocation5 + $0x6a0] sm:$0xff]
    %v290 = vld [vmem:[#allocation5 + $0x6a8] sm:$0xff]
    %v291 = vld [vmem:[#allocation5 + $0x6b0] sm:$0xff]
    %v292 = vld [vmem:[#allocation5 + $0x6b8] sm:$0xff]
    %v293 = vld [vmem:[#allocation5 + $0x6c0] sm:$0xff]
    %v294 = vld [vmem:[#allocation5 + $0x6c8] sm:$0xff]
    %v295 = vld [vmem:[#allocation5 + $0x6d0] sm:$0xff]
    %v296 = vld [vmem:[#allocation5 + $0x6d8] sm:$0xff]
    %v297 = vld [vmem:[#allocation5 + $0x6e0] sm:$0xff]
    %v298 = vld [vmem:[#allocation5 + $0x6e8] sm:$0xff]
    %v299 = vld [vmem:[#allocation5 + $0x6f0] sm:$0xff]
    %v300 = vld [vmem:[#allocation5 + $0x6f8] sm:$0xff]
    %v301 = vld [vmem:[#allocation5 + $0x700] sm:$0xff]
    %v302 = vld [vmem:[#allocation5 + $0x708] sm:$0xff]
    %v303 = vld [vmem:[#allocation5 + $0x710] sm:$0xff]
    %v304 = vld [vmem:[#allocation5 + $0x718] sm:$0xff]
    %v305 = vld [vmem:[#allocation5 + $0x720] sm:$0xff]
    %v306 = vld [vmem:[#allocation5 + $0x728] sm:$0xff]
    %v307 = vld [vmem:[#allocation5 + $0x730] sm:$0xff]
    %v308 = vld [vmem:[#allocation5 + $0x738] sm:$0xff]
    %v309 = vld [vmem:[#allocation5 + $0x740] sm:$0xff]
    %v310 = vld [vmem:[#allocation5 + $0x748] sm:$0xff]
    %v311 = vld [vmem:[#allocation5 + $0x750] sm:$0xff]
    %v312 = vld [vmem:[#allocation5 + $0x758] sm:$0xff]
    %v313 = vld [vmem:[#allocation5 + $0x760] sm:$0xff]
    %v314 = vld [vmem:[#allocation5 + $0x768] sm:$0xff]
    %v315 = vld [vmem:[#allocation5 + $0x770] sm:$0xff]
    %v316 = vld [vmem:[#allocation5 + $0x778] sm:$0xff]
    %v317 = vld [vmem:[#allocation5 + $0x780] sm:$0xff]
    %v318 = vld [vmem:[#allocation5 + $0x788] sm:$0xff]
    %v319 = vld [vmem:[#allocation5 + $0x790] sm:$0xff]
    %v320 = vld [vmem:[#allocation5 + $0x798] sm:$0xff]
    %v321 = vld [vmem:[#allocation5 + $0x7a0] sm:$0xff]
    %v322 = vld [vmem:[#allocation5 + $0x7a8] sm:$0xff]
    %v323 = vld [vmem:[#allocation5 + $0x7b0] sm:$0xff]
    %v324 = vld [vmem:[#allocation5 + $0x7b8] sm:$0xff]
    %v325 = vld [vmem:[#allocation5 + $0x7c0] sm:$0xff]
    %v326 = vld [vmem:[#allocation5 + $0x7c8] sm:$0xff]
    %v327 = vld [vmem:[#allocation5 + $0x7d0] sm:$0xff]
    %v328 = vld [vmem:[#allocation5 + $0x7d8] sm:$0xff]
    %v329 = vld [vmem:[#allocation5 + $0x7e0] sm:$0xff]
    %v330 = vld [vmem:[#allocation5 + $0x7e8] sm:$0xff]
    %v331 = vld [vmem:[#allocation5 + $0x7f0] sm:$0xff]
    %v332 = vld [vmem:[#allocation5 + $0x7f8] sm:$0xff]
    %v333 = vld [vmem:[#allocation7] sm:$0xf]
    %v335 = vlaneseq
    %v336 = vshrl.u32 %v335, 7
    %v337 = vsub.s32 0, %v336
    %v338 = vrot.slane %v333, %v337
    %v339 = vlaneseq
    %v340 = vshrl.u32 %v339, 7
    %v341 = vsub.s32 1, %v340
    %v342 = vrot.slane %v333, %v341
    %v343 = vlaneseq
    %v344 = vshrl.u32 %v343, 7
    %v345 = vsub.s32 2, %v344
    %v346 = vrot.slane %v333, %v345
    %v347 = vlaneseq
    %v348 = vshrl.u32 %v347, 7
    %v349 = vsub.s32 3, %v348
    %v350 = vrot.slane %v333, %v349
    %v359 = vunpack.c.l.b16 %v73
    %v360 = vunpack.c.h.b16 %v73
    %v361 = vunpack.c.l.b16 %v74
    %v362 = vunpack.c.h.b16 %v74
    %v363 = vunpack.c.l.b16 %v75
    %v364 = vunpack.c.h.b16 %v75
    %v365 = vunpack.c.l.b16 %v76
    %v366 = vunpack.c.h.b16 %v76
    %v367 = vpack.c.b16 %v359, %v359
    %v368 = vpack.c.b16 %v360, %v360
    %v369 = vpack.c.b16 %v361, %v361
    %v370 = vpack.c.b16 %v362, %v362
    %v371 = vpack.c.b16 %v363, %v363
    %v372 = vpack.c.b16 %v364, %v364
    %v373 = vpack.c.b16 %v365, %v365
    %v374 = vpack.c.b16 %v366, %v366
    %v639 = vunpack.c.l.b16 %v77
    %v640 = vunpack.c.h.b16 %v77
    %v641 = vunpack.c.l.b16 %v78
    %v642 = vunpack.c.h.b16 %v78
    %v643 = vunpack.c.l.b16 %v79
    %v644 = vunpack.c.h.b16 %v79
    %v645 = vunpack.c.l.b16 %v80
    %v646 = vunpack.c.h.b16 %v80
    %v647 = vunpack.c.l.b16 %v81
    %v648 = vunpack.c.h.b16 %v81
    %v649 = vunpack.c.l.b16 %v82
    %v650 = vunpack.c.h.b16 %v82
    %v651 = vunpack.c.l.b16 %v83
    %v652 = vunpack.c.h.b16 %v83
    %v653 = vunpack.c.l.b16 %v84
    %v654 = vunpack.c.h.b16 %v84
    %v655 = vunpack.c.l.b16 %v85
    %v656 = vunpack.c.h.b16 %v85
    %v657 = vunpack.c.l.b16 %v86
    %v658 = vunpack.c.h.b16 %v86
    %v659 = vunpack.c.l.b16 %v87
    %v660 = vunpack.c.h.b16 %v87
    %v661 = vunpack.c.l.b16 %v88
    %v662 = vunpack.c.h.b16 %v88
    %v663 = vunpack.c.l.b16 %v89
    %v664 = vunpack.c.h.b16 %v89
    %v665 = vunpack.c.l.b16 %v90
    %v666 = vunpack.c.h.b16 %v90
    %v667 = vunpack.c.l.b16 %v91
    %v668 = vunpack.c.h.b16 %v91
    %v669 = vunpack.c.l.b16 %v92
    %v670 = vunpack.c.h.b16 %v92
    %v671 = vunpack.c.l.b16 %v93
    %v672 = vunpack.c.h.b16 %v93
    %v673 = vunpack.c.l.b16 %v94
    %v674 = vunpack.c.h.b16 %v94
    %v675 = vunpack.c.l.b16 %v95
    %v676 = vunpack.c.h.b16 %v95
    %v677 = vunpack.c.l.b16 %v96
    %v678 = vunpack.c.h.b16 %v96
    %v679 = vunpack.c.l.b16 %v97
    %v680 = vunpack.c.h.b16 %v97
    %v681 = vunpack.c.l.b16 %v98
    %v682 = vunpack.c.h.b16 %v98
    %v683 = vunpack.c.l.b16 %v99
    %v684 = vunpack.c.h.b16 %v99
    %v685 = vunpack.c.l.b16 %v100
    %v686 = vunpack.c.h.b16 %v100
    %v687 = vunpack.c.l.b16 %v101
    %v688 = vunpack.c.h.b16 %v101
    %v689 = vunpack.c.l.b16 %v102
    %v690 = vunpack.c.h.b16 %v102
    %v691 = vunpack.c.l.b16 %v103
    %v692 = vunpack.c.h.b16 %v103
    %v693 = vunpack.c.l.b16 %v104
    %v694 = vunpack.c.h.b16 %v104
    %v695 = vunpack.c.l.b16 %v105
    %v696 = vunpack.c.h.b16 %v105
    %v697 = vunpack.c.l.b16 %v106
    %v698 = vunpack.c.h.b16 %v106
    %v699 = vunpack.c.l.b16 %v107
    %v700 = vunpack.c.h.b16 %v107
    %v701 = vunpack.c.l.b16 %v108
    %v702 = vunpack.c.h.b16 %v108
    %v703 = vunpack.c.l.b16 %v109
    %v704 = vunpack.c.h.b16 %v109
    %v705 = vunpack.c.l.b16 %v110
    %v706 = vunpack.c.h.b16 %v110
    %v707 = vunpack.c.l.b16 %v111
    %v708 = vunpack.c.h.b16 %v111
    %v709 = vunpack.c.l.b16 %v112
    %v710 = vunpack.c.h.b16 %v112
    %v711 = vunpack.c.l.b16 %v113
    %v712 = vunpack.c.h.b16 %v113
    %v713 = vunpack.c.l.b16 %v114
    %v714 = vunpack.c.h.b16 %v114
    %v715 = vunpack.c.l.b16 %v115
    %v716 = vunpack.c.h.b16 %v115
    %v717 = vunpack.c.l.b16 %v116
    %v718 = vunpack.c.h.b16 %v116
    %v719 = vunpack.c.l.b16 %v117
    %v720 = vunpack.c.h.b16 %v117
    %v721 = vunpack.c.l.b16 %v118
    %v722 = vunpack.c.h.b16 %v118
    %v723 = vunpack.c.l.b16 %v119
    %v724 = vunpack.c.h.b16 %v119
    %v725 = vunpack.c.l.b16 %v120
    %v726 = vunpack.c.h.b16 %v120
    %v727 = vunpack.c.l.b16 %v121
    %v728 = vunpack.c.h.b16 %v121
    %v729 = vunpack.c.l.b16 %v122
    %v730 = vunpack.c.h.b16 %v122
    %v731 = vunpack.c.l.b16 %v123
    %v732 = vunpack.c.h.b16 %v123
    %v733 = vunpack.c.l.b16 %v124
    %v734 = vunpack.c.h.b16 %v124
    %v735 = vunpack.c.l.b16 %v125
    %v736 = vunpack.c.h.b16 %v125
    %v737 = vunpack.c.l.b16 %v126
    %v738 = vunpack.c.h.b16 %v126
    %v739 = vunpack.c.l.b16 %v127
    %v740 = vunpack.c.h.b16 %v127
    %v741 = vunpack.c.l.b16 %v128
    %v742 = vunpack.c.h.b16 %v128
    %v743 = vunpack.c.l.b16 %v129
    %v744 = vunpack.c.h.b16 %v129
    %v745 = vunpack.c.l.b16 %v130
    %v746 = vunpack.c.h.b16 %v130
    %v747 = vunpack.c.l.b16 %v131
    %v748 = vunpack.c.h.b16 %v131
    %v749 = vunpack.c.l.b16 %v132
    %v750 = vunpack.c.h.b16 %v132
    %v751 = vunpack.c.l.b16 %v133
    %v752 = vunpack.c.h.b16 %v133
    %v753 = vunpack.c.l.b16 %v134
    %v754 = vunpack.c.h.b16 %v134
    %v755 = vunpack.c.l.b16 %v135
    %v756 = vunpack.c.h.b16 %v135
    %v757 = vunpack.c.l.b16 %v136
    %v758 = vunpack.c.h.b16 %v136
    %v759 = vunpack.c.l.b16 %v137
    %v760 = vunpack.c.h.b16 %v137
    %v761 = vunpack.c.l.b16 %v138
    %v762 = vunpack.c.h.b16 %v138
    %v763 = vunpack.c.l.b16 %v139
    %v764 = vunpack.c.h.b16 %v139
    %v765 = vunpack.c.l.b16 %v140
    %v766 = vunpack.c.h.b16 %v140
    %v767 = vunpack.c.l.b16 %v141
    %v768 = vunpack.c.h.b16 %v141
    %v769 = vunpack.c.l.b16 %v142
    %v770 = vunpack.c.h.b16 %v142
    %v771 = vunpack.c.l.b16 %v143
    %v772 = vunpack.c.h.b16 %v143
    %v773 = vunpack.c.l.b16 %v144
    %v774 = vunpack.c.h.b16 %v144
    %v775 = vunpack.c.l.b16 %v145
    %v776 = vunpack.c.h.b16 %v145
    %v777 = vunpack.c.l.b16 %v146
    %v778 = vunpack.c.h.b16 %v146
    %v779 = vunpack.c.l.b16 %v147
    %v780 = vunpack.c.h.b16 %v147
    %v781 = vunpack.c.l.b16 %v148
    %v782 = vunpack.c.h.b16 %v148
    %v783 = vunpack.c.l.b16 %v149
    %v784 = vunpack.c.h.b16 %v149
    %v785 = vunpack.c.l.b16 %v150
    %v786 = vunpack.c.h.b16 %v150
    %v787 = vunpack.c.l.b16 %v151
    %v788 = vunpack.c.h.b16 %v151
    %v789 = vunpack.c.l.b16 %v152
    %v790 = vunpack.c.h.b16 %v152
    %v791 = vunpack.c.l.b16 %v153
    %v792 = vunpack.c.h.b16 %v153
    %v793 = vunpack.c.l.b16 %v154
    %v794 = vunpack.c.h.b16 %v154
    %v795 = vunpack.c.l.b16 %v155
    %v796 = vunpack.c.h.b16 %v155
    %v797 = vunpack.c.l.b16 %v156
    %v798 = vunpack.c.h.b16 %v156
    %v799 = vunpack.c.l.b16 %v157
    %v800 = vunpack.c.h.b16 %v157
    %v801 = vunpack.c.l.b16 %v158
    %v802 = vunpack.c.h.b16 %v158
    %v803 = vunpack.c.l.b16 %v159
    %v804 = vunpack.c.h.b16 %v159
    %v805 = vunpack.c.l.b16 %v160
    %v806 = vunpack.c.h.b16 %v160
    %v807 = vunpack.c.l.b16 %v161
    %v808 = vunpack.c.h.b16 %v161
    %v809 = vunpack.c.l.b16 %v162
    %v810 = vunpack.c.h.b16 %v162
    %v811 = vunpack.c.l.b16 %v163
    %v812 = vunpack.c.h.b16 %v163
    %v813 = vunpack.c.l.b16 %v164
    %v814 = vunpack.c.h.b16 %v164
    %v815 = vunpack.c.l.b16 %v165
    %v816 = vunpack.c.h.b16 %v165
    %v817 = vunpack.c.l.b16 %v166
    %v818 = vunpack.c.h.b16 %v166
    %v819 = vunpack.c.l.b16 %v167
    %v820 = vunpack.c.h.b16 %v167
    %v821 = vunpack.c.l.b16 %v168
    %v822 = vunpack.c.h.b16 %v168
    %v823 = vunpack.c.l.b16 %v169
    %v824 = vunpack.c.h.b16 %v169
    %v825 = vunpack.c.l.b16 %v170
    %v826 = vunpack.c.h.b16 %v170
    %v827 = vunpack.c.l.b16 %v171
    %v828 = vunpack.c.h.b16 %v171
    %v829 = vunpack.c.l.b16 %v172
    %v830 = vunpack.c.h.b16 %v172
    %v831 = vunpack.c.l.b16 %v173
    %v832 = vunpack.c.h.b16 %v173
    %v833 = vunpack.c.l.b16 %v174
    %v834 = vunpack.c.h.b16 %v174
    %v835 = vunpack.c.l.b16 %v175
    %v836 = vunpack.c.h.b16 %v175
    %v837 = vunpack.c.l.b16 %v176
    %v838 = vunpack.c.h.b16 %v176
    %v839 = vunpack.c.l.b16 %v177
    %v840 = vunpack.c.h.b16 %v177
    %v841 = vunpack.c.l.b16 %v178
    %v842 = vunpack.c.h.b16 %v178
    %v843 = vunpack.c.l.b16 %v179
    %v844 = vunpack.c.h.b16 %v179
    %v845 = vunpack.c.l.b16 %v180
    %v846 = vunpack.c.h.b16 %v180
    %v847 = vunpack.c.l.b16 %v181
    %v848 = vunpack.c.h.b16 %v181
    %v849 = vunpack.c.l.b16 %v182
    %v850 = vunpack.c.h.b16 %v182
    %v851 = vunpack.c.l.b16 %v183
    %v852 = vunpack.c.h.b16 %v183
    %v853 = vunpack.c.l.b16 %v184
    %v854 = vunpack.c.h.b16 %v184
    %v855 = vunpack.c.l.b16 %v185
    %v856 = vunpack.c.h.b16 %v185
    %v857 = vunpack.c.l.b16 %v186
    %v858 = vunpack.c.h.b16 %v186
    %v859 = vunpack.c.l.b16 %v187
    %v860 = vunpack.c.h.b16 %v187
    %v861 = vunpack.c.l.b16 %v188
    %v862 = vunpack.c.h.b16 %v188
    %v863 = vunpack.c.l.b16 %v189
    %v864 = vunpack.c.h.b16 %v189
    %v865 = vunpack.c.l.b16 %v190
    %v866 = vunpack.c.h.b16 %v190
    %v867 = vunpack.c.l.b16 %v191
    %v868 = vunpack.c.h.b16 %v191
    %v869 = vunpack.c.l.b16 %v192
    %v870 = vunpack.c.h.b16 %v192
    %v871 = vunpack.c.l.b16 %v193
    %v872 = vunpack.c.h.b16 %v193
    %v873 = vunpack.c.l.b16 %v194
    %v874 = vunpack.c.h.b16 %v194
    %v875 = vunpack.c.l.b16 %v195
    %v876 = vunpack.c.h.b16 %v195
    %v877 = vunpack.c.l.b16 %v196
    %v878 = vunpack.c.h.b16 %v196
    %v879 = vunpack.c.l.b16 %v197
    %v880 = vunpack.c.h.b16 %v197
    %v881 = vunpack.c.l.b16 %v198
    %v882 = vunpack.c.h.b16 %v198
    %v883 = vunpack.c.l.b16 %v199
    %v884 = vunpack.c.h.b16 %v199
    %v885 = vunpack.c.l.b16 %v200
    %v886 = vunpack.c.h.b16 %v200
    %v887 = vunpack.c.l.b16 %v201
    %v888 = vunpack.c.h.b16 %v201
    %v889 = vunpack.c.l.b16 %v202
    %v890 = vunpack.c.h.b16 %v202
    %v891 = vunpack.c.l.b16 %v203
    %v892 = vunpack.c.h.b16 %v203
    %v893 = vunpack.c.l.b16 %v204
    %v894 = vunpack.c.h.b16 %v204
    %v895 = vunpack.c.l.b16 %v205
    %v896 = vunpack.c.h.b16 %v205
    %v897 = vunpack.c.l.b16 %v206
    %v898 = vunpack.c.h.b16 %v206
    %v899 = vunpack.c.l.b16 %v207
    %v900 = vunpack.c.h.b16 %v207
    %v901 = vunpack.c.l.b16 %v208
    %v902 = vunpack.c.h.b16 %v208
    %v903 = vunpack.c.l.b16 %v209
    %v904 = vunpack.c.h.b16 %v209
    %v905 = vunpack.c.l.b16 %v210
    %v906 = vunpack.c.h.b16 %v210
    %v907 = vunpack.c.l.b16 %v211
    %v908 = vunpack.c.h.b16 %v211
    %v909 = vunpack.c.l.b16 %v212
    %v910 = vunpack.c.h.b16 %v212
    %v911 = vunpack.c.l.b16 %v213
    %v912 = vunpack.c.h.b16 %v213
    %v913 = vunpack.c.l.b16 %v214
    %v914 = vunpack.c.h.b16 %v214
    %v915 = vunpack.c.l.b16 %v215
    %v916 = vunpack.c.h.b16 %v215
    %v917 = vunpack.c.l.b16 %v216
    %v918 = vunpack.c.h.b16 %v216
    %v919 = vunpack.c.l.b16 %v217
    %v920 = vunpack.c.h.b16 %v217
    %v921 = vunpack.c.l.b16 %v218
    %v922 = vunpack.c.h.b16 %v218
    %v923 = vunpack.c.l.b16 %v219
    %v924 = vunpack.c.h.b16 %v219
    %v925 = vunpack.c.l.b16 %v220
    %v926 = vunpack.c.h.b16 %v220
    %v927 = vunpack.c.l.b16 %v221
    %v928 = vunpack.c.h.b16 %v221
    %v929 = vunpack.c.l.b16 %v222
    %v930 = vunpack.c.h.b16 %v222
    %v931 = vunpack.c.l.b16 %v223
    %v932 = vunpack.c.h.b16 %v223
    %v933 = vunpack.c.l.b16 %v224
    %v934 = vunpack.c.h.b16 %v224
    %v935 = vunpack.c.l.b16 %v225
    %v936 = vunpack.c.h.b16 %v225
    %v937 = vunpack.c.l.b16 %v226
    %v938 = vunpack.c.h.b16 %v226
    %v939 = vunpack.c.l.b16 %v227
    %v940 = vunpack.c.h.b16 %v227
    %v941 = vunpack.c.l.b16 %v228
    %v942 = vunpack.c.h.b16 %v228
    %v943 = vunpack.c.l.b16 %v229
    %v944 = vunpack.c.h.b16 %v229
    %v945 = vunpack.c.l.b16 %v230
    %v946 = vunpack.c.h.b16 %v230
    %v947 = vunpack.c.l.b16 %v231
    %v948 = vunpack.c.h.b16 %v231
    %v949 = vunpack.c.l.b16 %v232
    %v950 = vunpack.c.h.b16 %v232
    %v951 = vunpack.c.l.b16 %v233
    %v952 = vunpack.c.h.b16 %v233
    %v953 = vunpack.c.l.b16 %v234
    %v954 = vunpack.c.h.b16 %v234
    %v955 = vunpack.c.l.b16 %v235
    %v956 = vunpack.c.h.b16 %v235
    %v957 = vunpack.c.l.b16 %v236
    %v958 = vunpack.c.h.b16 %v236
    %v959 = vunpack.c.l.b16 %v237
    %v960 = vunpack.c.h.b16 %v237
    %v961 = vunpack.c.l.b16 %v238
    %v962 = vunpack.c.h.b16 %v238
    %v963 = vunpack.c.l.b16 %v239
    %v964 = vunpack.c.h.b16 %v239
    %v965 = vunpack.c.l.b16 %v240
    %v966 = vunpack.c.h.b16 %v240
    %v967 = vunpack.c.l.b16 %v241
    %v968 = vunpack.c.h.b16 %v241
    %v969 = vunpack.c.l.b16 %v242
    %v970 = vunpack.c.h.b16 %v242
    %v971 = vunpack.c.l.b16 %v243
    %v972 = vunpack.c.h.b16 %v243
    %v973 = vunpack.c.l.b16 %v244
    %v974 = vunpack.c.h.b16 %v244
    %v975 = vunpack.c.l.b16 %v245
    %v976 = vunpack.c.h.b16 %v245
    %v977 = vunpack.c.l.b16 %v246
    %v978 = vunpack.c.h.b16 %v246
    %v979 = vunpack.c.l.b16 %v247
    %v980 = vunpack.c.h.b16 %v247
    %v981 = vunpack.c.l.b16 %v248
    %v982 = vunpack.c.h.b16 %v248
    %v983 = vunpack.c.l.b16 %v249
    %v984 = vunpack.c.h.b16 %v249
    %v985 = vunpack.c.l.b16 %v250
    %v986 = vunpack.c.h.b16 %v250
    %v987 = vunpack.c.l.b16 %v251
    %v988 = vunpack.c.h.b16 %v251
    %v989 = vunpack.c.l.b16 %v252
    %v990 = vunpack.c.h.b16 %v252
    %v991 = vunpack.c.l.b16 %v253
    %v992 = vunpack.c.h.b16 %v253
    %v993 = vunpack.c.l.b16 %v254
    %v994 = vunpack.c.h.b16 %v254
    %v995 = vunpack.c.l.b16 %v255
    %v996 = vunpack.c.h.b16 %v255
    %v997 = vunpack.c.l.b16 %v256
    %v998 = vunpack.c.h.b16 %v256
    %v999 = vunpack.c.l.b16 %v257
    %v1000 = vunpack.c.h.b16 %v257
    %v1001 = vunpack.c.l.b16 %v258
    %v1002 = vunpack.c.h.b16 %v258
    %v1003 = vunpack.c.l.b16 %v259
    %v1004 = vunpack.c.h.b16 %v259
    %v1005 = vunpack.c.l.b16 %v260
    %v1006 = vunpack.c.h.b16 %v260
    %v1007 = vunpack.c.l.b16 %v261
    %v1008 = vunpack.c.h.b16 %v261
    %v1009 = vunpack.c.l.b16 %v262
    %v1010 = vunpack.c.h.b16 %v262
    %v1011 = vunpack.c.l.b16 %v263
    %v1012 = vunpack.c.h.b16 %v263
    %v1013 = vunpack.c.l.b16 %v264
    %v1014 = vunpack.c.h.b16 %v264
    %v1015 = vunpack.c.l.b16 %v265
    %v1016 = vunpack.c.h.b16 %v265
    %v1017 = vunpack.c.l.b16 %v266
    %v1018 = vunpack.c.h.b16 %v266
    %v1019 = vunpack.c.l.b16 %v267
    %v1020 = vunpack.c.h.b16 %v267
    %v1021 = vunpack.c.l.b16 %v268
    %v1022 = vunpack.c.h.b16 %v268
    %v1023 = vunpack.c.l.b16 %v269
    %v1024 = vunpack.c.h.b16 %v269
    %v1025 = vunpack.c.l.b16 %v270
    %v1026 = vunpack.c.h.b16 %v270
    %v1027 = vunpack.c.l.b16 %v271
    %v1028 = vunpack.c.h.b16 %v271
    %v1029 = vunpack.c.l.b16 %v272
    %v1030 = vunpack.c.h.b16 %v272
    %v1031 = vunpack.c.l.b16 %v273
    %v1032 = vunpack.c.h.b16 %v273
    %v1033 = vunpack.c.l.b16 %v274
    %v1034 = vunpack.c.h.b16 %v274
    %v1035 = vunpack.c.l.b16 %v275
    %v1036 = vunpack.c.h.b16 %v275
    %v1037 = vunpack.c.l.b16 %v276
    %v1038 = vunpack.c.h.b16 %v276
    %v1039 = vunpack.c.l.b16 %v277
    %v1040 = vunpack.c.h.b16 %v277
    %v1041 = vunpack.c.l.b16 %v278
    %v1042 = vunpack.c.h.b16 %v278
    %v1043 = vunpack.c.l.b16 %v279
    %v1044 = vunpack.c.h.b16 %v279
    %v1045 = vunpack.c.l.b16 %v280
    %v1046 = vunpack.c.h.b16 %v280
    %v1047 = vunpack.c.l.b16 %v281
    %v1048 = vunpack.c.h.b16 %v281
    %v1049 = vunpack.c.l.b16 %v282
    %v1050 = vunpack.c.h.b16 %v282
    %v1051 = vunpack.c.l.b16 %v283
    %v1052 = vunpack.c.h.b16 %v283
    %v1053 = vunpack.c.l.b16 %v284
    %v1054 = vunpack.c.h.b16 %v284
    %v1055 = vunpack.c.l.b16 %v285
    %v1056 = vunpack.c.h.b16 %v285
    %v1057 = vunpack.c.l.b16 %v286
    %v1058 = vunpack.c.h.b16 %v286
    %v1059 = vunpack.c.l.b16 %v287
    %v1060 = vunpack.c.h.b16 %v287
    %v1061 = vunpack.c.l.b16 %v288
    %v1062 = vunpack.c.h.b16 %v288
    %v1063 = vunpack.c.l.b16 %v289
    %v1064 = vunpack.c.h.b16 %v289
    %v1065 = vunpack.c.l.b16 %v290
    %v1066 = vunpack.c.h.b16 %v290
    %v1067 = vunpack.c.l.b16 %v291
    %v1068 = vunpack.c.h.b16 %v291
    %v1069 = vunpack.c.l.b16 %v292
    %v1070 = vunpack.c.h.b16 %v292
    %v1071 = vunpack.c.l.b16 %v293
    %v1072 = vunpack.c.h.b16 %v293
    %v1073 = vunpack.c.l.b16 %v294
    %v1074 = vunpack.c.h.b16 %v294
    %v1075 = vunpack.c.l.b16 %v295
    %v1076 = vunpack.c.h.b16 %v295
    %v1077 = vunpack.c.l.b16 %v296
    %v1078 = vunpack.c.h.b16 %v296
    %v1079 = vunpack.c.l.b16 %v297
    %v1080 = vunpack.c.h.b16 %v297
    %v1081 = vunpack.c.l.b16 %v298
    %v1082 = vunpack.c.h.b16 %v298
    %v1083 = vunpack.c.l.b16 %v299
    %v1084 = vunpack.c.h.b16 %v299
    %v1085 = vunpack.c.l.b16 %v300
    %v1086 = vunpack.c.h.b16 %v300
    %v1087 = vunpack.c.l.b16 %v301
    %v1088 = vunpack.c.h.b16 %v301
    %v1089 = vunpack.c.l.b16 %v302
    %v1090 = vunpack.c.h.b16 %v302
    %v1091 = vunpack.c.l.b16 %v303
    %v1092 = vunpack.c.h.b16 %v303
    %v1093 = vunpack.c.l.b16 %v304
    %v1094 = vunpack.c.h.b16 %v304
    %v1095 = vunpack.c.l.b16 %v305
    %v1096 = vunpack.c.h.b16 %v305
    %v1097 = vunpack.c.l.b16 %v306
    %v1098 = vunpack.c.h.b16 %v306
    %v1099 = vunpack.c.l.b16 %v307
    %v1100 = vunpack.c.h.b16 %v307
    %v1101 = vunpack.c.l.b16 %v308
    %v1102 = vunpack.c.h.b16 %v308
    %v1103 = vunpack.c.l.b16 %v309
    %v1104 = vunpack.c.h.b16 %v309
    %v1105 = vunpack.c.l.b16 %v310
    %v1106 = vunpack.c.h.b16 %v310
    %v1107 = vunpack.c.l.b16 %v311
    %v1108 = vunpack.c.h.b16 %v311
    %v1109 = vunpack.c.l.b16 %v312
    %v1110 = vunpack.c.h.b16 %v312
    %v1111 = vunpack.c.l.b16 %v313
    %v1112 = vunpack.c.h.b16 %v313
    %v1113 = vunpack.c.l.b16 %v314
    %v1114 = vunpack.c.h.b16 %v314
    %v1115 = vunpack.c.l.b16 %v315
    %v1116 = vunpack.c.h.b16 %v315
    %v1117 = vunpack.c.l.b16 %v316
    %v1118 = vunpack.c.h.b16 %v316
    %v1119 = vunpack.c.l.b16 %v317
    %v1120 = vunpack.c.h.b16 %v317
    %v1121 = vunpack.c.l.b16 %v318
    %v1122 = vunpack.c.h.b16 %v318
    %v1123 = vunpack.c.l.b16 %v319
    %v1124 = vunpack.c.h.b16 %v319
    %v1125 = vunpack.c.l.b16 %v320
    %v1126 = vunpack.c.h.b16 %v320
    %v1127 = vunpack.c.l.b16 %v321
    %v1128 = vunpack.c.h.b16 %v321
    %v1129 = vunpack.c.l.b16 %v322
    %v1130 = vunpack.c.h.b16 %v322
    %v1131 = vunpack.c.l.b16 %v323
    %v1132 = vunpack.c.h.b16 %v323
    %v1133 = vunpack.c.l.b16 %v324
    %v1134 = vunpack.c.h.b16 %v324
    %v1135 = vunpack.c.l.b16 %v325
    %v1136 = vunpack.c.h.b16 %v325
    %v1137 = vunpack.c.l.b16 %v326
    %v1138 = vunpack.c.h.b16 %v326
    %v1139 = vunpack.c.l.b16 %v327
    %v1140 = vunpack.c.h.b16 %v327
    %v1141 = vunpack.c.l.b16 %v328
    %v1142 = vunpack.c.h.b16 %v328
    %v1143 = vunpack.c.l.b16 %v329
    %v1144 = vunpack.c.h.b16 %v329
    %v1145 = vunpack.c.l.b16 %v330
    %v1146 = vunpack.c.h.b16 %v330
    %v1147 = vunpack.c.l.b16 %v331
    %v1148 = vunpack.c.h.b16 %v331
    %v1149 = vunpack.c.l.b16 %v332
    %v1150 = vunpack.c.h.b16 %v332
    %v1151 = vpack.c.b16 %v643, %v639
    %v1152 = vpack.c.b16 %v644, %v640
    %v1153 = vpack.c.b16 %v645, %v641
    %v1154 = vpack.c.b16 %v646, %v642
    %v1155 = vpack.c.b16 %v651, %v647
    %v1156 = vpack.c.b16 %v652, %v648
    %v1157 = vpack.c.b16 %v653, %v649
    %v1158 = vpack.c.b16 %v654, %v650
    %v1159 = vpack.c.b16 %v659, %v655
    %v1160 = vpack.c.b16 %v660, %v656
    %v1161 = vpack.c.b16 %v661, %v657
    %v1162 = vpack.c.b16 %v662, %v658
    %v1163 = vpack.c.b16 %v667, %v663
    %v1164 = vpack.c.b16 %v668, %v664
    %v1165 = vpack.c.b16 %v669, %v665
    %v1166 = vpack.c.b16 %v670, %v666
    %v1167 = vpack.c.b16 %v675, %v671
    %v1168 = vpack.c.b16 %v676, %v672
    %v1169 = vpack.c.b16 %v677, %v673
    %v1170 = vpack.c.b16 %v678, %v674
    %v1171 = vpack.c.b16 %v683, %v679
    %v1172 = vpack.c.b16 %v684, %v680
    %v1173 = vpack.c.b16 %v685, %v681
    %v1174 = vpack.c.b16 %v686, %v682
    %v1175 = vpack.c.b16 %v691, %v687
    %v1176 = vpack.c.b16 %v692, %v688
    %v1177 = vpack.c.b16 %v693, %v689
    %v1178 = vpack.c.b16 %v694, %v690
    %v1179 = vpack.c.b16 %v699, %v695
    %v1180 = vpack.c.b16 %v700, %v696
    %v1181 = vpack.c.b16 %v701, %v697
    %v1182 = vpack.c.b16 %v702, %v698
    %v1183 = vpack.c.b16 %v707, %v703
    %v1184 = vpack.c.b16 %v708, %v704
    %v1185 = vpack.c.b16 %v709, %v705
    %v1186 = vpack.c.b16 %v710, %v706
    %v1187 = vpack.c.b16 %v715, %v711
    %v1188 = vpack.c.b16 %v716, %v712
    %v1189 = vpack.c.b16 %v717, %v713
    %v1190 = vpack.c.b16 %v718, %v714
    %v1191 = vpack.c.b16 %v723, %v719
    %v1192 = vpack.c.b16 %v724, %v720
    %v1193 = vpack.c.b16 %v725, %v721
    %v1194 = vpack.c.b16 %v726, %v722
    %v1195 = vpack.c.b16 %v731, %v727
    %v1196 = vpack.c.b16 %v732, %v728
    %v1197 = vpack.c.b16 %v733, %v729
    %v1198 = vpack.c.b16 %v734, %v730
    %v1199 = vpack.c.b16 %v739, %v735
    %v1200 = vpack.c.b16 %v740, %v736
    %v1201 = vpack.c.b16 %v741, %v737
    %v1202 = vpack.c.b16 %v742, %v738
    %v1203 = vpack.c.b16 %v747, %v743
    %v1204 = vpack.c.b16 %v748, %v744
    %v1205 = vpack.c.b16 %v749, %v745
    %v1206 = vpack.c.b16 %v750, %v746
    %v1207 = vpack.c.b16 %v755, %v751
    %v1208 = vpack.c.b16 %v756, %v752
    %v1209 = vpack.c.b16 %v757, %v753
    %v1210 = vpack.c.b16 %v758, %v754
    %v1211 = vpack.c.b16 %v763, %v759
    %v1212 = vpack.c.b16 %v764, %v760
    %v1213 = vpack.c.b16 %v765, %v761
    %v1214 = vpack.c.b16 %v766, %v762
    %v1215 = vpack.c.b16 %v771, %v767
    %v1216 = vpack.c.b16 %v772, %v768
    %v1217 = vpack.c.b16 %v773, %v769
    %v1218 = vpack.c.b16 %v774, %v770
    %v1219 = vpack.c.b16 %v779, %v775
    %v1220 = vpack.c.b16 %v780, %v776
    %v1221 = vpack.c.b16 %v781, %v777
    %v1222 = vpack.c.b16 %v782, %v778
    %v1223 = vpack.c.b16 %v787, %v783
    %v1224 = vpack.c.b16 %v788, %v784
    %v1225 = vpack.c.b16 %v789, %v785
    %v1226 = vpack.c.b16 %v790, %v786
    %v1227 = vpack.c.b16 %v795, %v791
    %v1228 = vpack.c.b16 %v796, %v792
    %v1229 = vpack.c.b16 %v797, %v793
    %v1230 = vpack.c.b16 %v798, %v794
    %v1231 = vpack.c.b16 %v803, %v799
    %v1232 = vpack.c.b16 %v804, %v800
    %v1233 = vpack.c.b16 %v805, %v801
    %v1234 = vpack.c.b16 %v806, %v802
    %v1235 = vpack.c.b16 %v811, %v807
    %v1236 = vpack.c.b16 %v812, %v808
    %v1237 = vpack.c.b16 %v813, %v809
    %v1238 = vpack.c.b16 %v814, %v810
    %v1239 = vpack.c.b16 %v819, %v815
    %v1240 = vpack.c.b16 %v820, %v816
    %v1241 = vpack.c.b16 %v821, %v817
    %v1242 = vpack.c.b16 %v822, %v818
    %v1243 = vpack.c.b16 %v827, %v823
    %v1244 = vpack.c.b16 %v828, %v824
    %v1245 = vpack.c.b16 %v829, %v825
    %v1246 = vpack.c.b16 %v830, %v826
    %v1247 = vpack.c.b16 %v835, %v831
    %v1248 = vpack.c.b16 %v836, %v832
    %v1249 = vpack.c.b16 %v837, %v833
    %v1250 = vpack.c.b16 %v838, %v834
    %v1251 = vpack.c.b16 %v843, %v839
    %v1252 = vpack.c.b16 %v844, %v840
    %v1253 = vpack.c.b16 %v845, %v841
    %v1254 = vpack.c.b16 %v846, %v842
    %v1255 = vpack.c.b16 %v851, %v847
    %v1256 = vpack.c.b16 %v852, %v848
    %v1257 = vpack.c.b16 %v853, %v849
    %v1258 = vpack.c.b16 %v854, %v850
    %v1259 = vpack.c.b16 %v859, %v855
    %v1260 = vpack.c.b16 %v860, %v856
    %v1261 = vpack.c.b16 %v861, %v857
    %v1262 = vpack.c.b16 %v862, %v858
    %v1263 = vpack.c.b16 %v867, %v863
    %v1264 = vpack.c.b16 %v868, %v864
    %v1265 = vpack.c.b16 %v869, %v865
    %v1266 = vpack.c.b16 %v870, %v866
    %v1267 = vpack.c.b16 %v875, %v871
    %v1268 = vpack.c.b16 %v876, %v872
    %v1269 = vpack.c.b16 %v877, %v873
    %v1270 = vpack.c.b16 %v878, %v874
    %v1271 = vpack.c.b16 %v883, %v879
    %v1272 = vpack.c.b16 %v884, %v880
    %v1273 = vpack.c.b16 %v885, %v881
    %v1274 = vpack.c.b16 %v886, %v882
    %v1275 = vpack.c.b16 %v891, %v887
    %v1276 = vpack.c.b16 %v892, %v888
    %v1277 = vpack.c.b16 %v893, %v889
    %v1278 = vpack.c.b16 %v894, %v890
    %v1279 = vpack.c.b16 %v899, %v895
    %v1280 = vpack.c.b16 %v900, %v896
    %v1281 = vpack.c.b16 %v901, %v897
    %v1282 = vpack.c.b16 %v902, %v898
    %v1283 = vpack.c.b16 %v907, %v903
    %v1284 = vpack.c.b16 %v908, %v904
    %v1285 = vpack.c.b16 %v909, %v905
    %v1286 = vpack.c.b16 %v910, %v906
    %v1287 = vpack.c.b16 %v915, %v911
    %v1288 = vpack.c.b16 %v916, %v912
    %v1289 = vpack.c.b16 %v917, %v913
    %v1290 = vpack.c.b16 %v918, %v914
    %v1291 = vpack.c.b16 %v923, %v919
    %v1292 = vpack.c.b16 %v924, %v920
    %v1293 = vpack.c.b16 %v925, %v921
    %v1294 = vpack.c.b16 %v926, %v922
    %v1295 = vpack.c.b16 %v931, %v927
    %v1296 = vpack.c.b16 %v932, %v928
    %v1297 = vpack.c.b16 %v933, %v929
    %v1298 = vpack.c.b16 %v934, %v930
    %v1299 = vpack.c.b16 %v939, %v935
    %v1300 = vpack.c.b16 %v940, %v936
    %v1301 = vpack.c.b16 %v941, %v937
    %v1302 = vpack.c.b16 %v942, %v938
    %v1303 = vpack.c.b16 %v947, %v943
    %v1304 = vpack.c.b16 %v948, %v944
    %v1305 = vpack.c.b16 %v949, %v945
    %v1306 = vpack.c.b16 %v950, %v946
    %v1307 = vpack.c.b16 %v955, %v951
    %v1308 = vpack.c.b16 %v956, %v952
    %v1309 = vpack.c.b16 %v957, %v953
    %v1310 = vpack.c.b16 %v958, %v954
    %v1311 = vpack.c.b16 %v963, %v959
    %v1312 = vpack.c.b16 %v964, %v960
    %v1313 = vpack.c.b16 %v965, %v961
    %v1314 = vpack.c.b16 %v966, %v962
    %v1315 = vpack.c.b16 %v971, %v967
    %v1316 = vpack.c.b16 %v972, %v968
    %v1317 = vpack.c.b16 %v973, %v969
    %v1318 = vpack.c.b16 %v974, %v970
    %v1319 = vpack.c.b16 %v979, %v975
    %v1320 = vpack.c.b16 %v980, %v976
    %v1321 = vpack.c.b16 %v981, %v977
    %v1322 = vpack.c.b16 %v982, %v978
    %v1323 = vpack.c.b16 %v987, %v983
    %v1324 = vpack.c.b16 %v988, %v984
    %v1325 = vpack.c.b16 %v989, %v985
    %v1326 = vpack.c.b16 %v990, %v986
    %v1327 = vpack.c.b16 %v995, %v991
    %v1328 = vpack.c.b16 %v996, %v992
    %v1329 = vpack.c.b16 %v997, %v993
    %v1330 = vpack.c.b16 %v998, %v994
    %v1331 = vpack.c.b16 %v1003, %v999
    %v1332 = vpack.c.b16 %v1004, %v1000
    %v1333 = vpack.c.b16 %v1005, %v1001
    %v1334 = vpack.c.b16 %v1006, %v1002
    %v1335 = vpack.c.b16 %v1011, %v1007
    %v1336 = vpack.c.b16 %v1012, %v1008
    %v1337 = vpack.c.b16 %v1013, %v1009
    %v1338 = vpack.c.b16 %v1014, %v1010
    %v1339 = vpack.c.b16 %v1019, %v1015
    %v1340 = vpack.c.b16 %v1020, %v1016
    %v1341 = vpack.c.b16 %v1021, %v1017
    %v1342 = vpack.c.b16 %v1022, %v1018
    %v1343 = vpack.c.b16 %v1027, %v1023
    %v1344 = vpack.c.b16 %v1028, %v1024
    %v1345 = vpack.c.b16 %v1029, %v1025
    %v1346 = vpack.c.b16 %v1030, %v1026
    %v1347 = vpack.c.b16 %v1035, %v1031
    %v1348 = vpack.c.b16 %v1036, %v1032
    %v1349 = vpack.c.b16 %v1037, %v1033
    %v1350 = vpack.c.b16 %v1038, %v1034
    %v1351 = vpack.c.b16 %v1043, %v1039
    %v1352 = vpack.c.b16 %v1044, %v1040
    %v1353 = vpack.c.b16 %v1045, %v1041
    %v1354 = vpack.c.b16 %v1046, %v1042
    %v1355 = vpack.c.b16 %v1051, %v1047
    %v1356 = vpack.c.b16 %v1052, %v1048
    %v1357 = vpack.c.b16 %v1053, %v1049
    %v1358 = vpack.c.b16 %v1054, %v1050
    %v1359 = vpack.c.b16 %v1059, %v1055
    %v1360 = vpack.c.b16 %v1060, %v1056
    %v1361 = vpack.c.b16 %v1061, %v1057
    %v1362 = vpack.c.b16 %v1062, %v1058
    %v1363 = vpack.c.b16 %v1067, %v1063
    %v1364 = vpack.c.b16 %v1068, %v1064
    %v1365 = vpack.c.b16 %v1069, %v1065
    %v1366 = vpack.c.b16 %v1070, %v1066
    %v1367 = vpack.c.b16 %v1075, %v1071
    %v1368 = vpack.c.b16 %v1076, %v1072
    %v1369 = vpack.c.b16 %v1077, %v1073
    %v1370 = vpack.c.b16 %v1078, %v1074
    %v1371 = vpack.c.b16 %v1083, %v1079
    %v1372 = vpack.c.b16 %v1084, %v1080
    %v1373 = vpack.c.b16 %v1085, %v1081
    %v1374 = vpack.c.b16 %v1086, %v1082
    %v1375 = vpack.c.b16 %v1091, %v1087
    %v1376 = vpack.c.b16 %v1092, %v1088
    %v1377 = vpack.c.b16 %v1093, %v1089
    %v1378 = vpack.c.b16 %v1094, %v1090
    %v1379 = vpack.c.b16 %v1099, %v1095
    %v1380 = vpack.c.b16 %v1100, %v1096
    %v1381 = vpack.c.b16 %v1101, %v1097
    %v1382 = vpack.c.b16 %v1102, %v1098
    %v1383 = vpack.c.b16 %v1107, %v1103
    %v1384 = vpack.c.b16 %v1108, %v1104
    %v1385 = vpack.c.b16 %v1109, %v1105
    %v1386 = vpack.c.b16 %v1110, %v1106
    %v1387 = vpack.c.b16 %v1115, %v1111
    %v1388 = vpack.c.b16 %v1116, %v1112
    %v1389 = vpack.c.b16 %v1117, %v1113
    %v1390 = vpack.c.b16 %v1118, %v1114
    %v1391 = vpack.c.b16 %v1123, %v1119
    %v1392 = vpack.c.b16 %v1124, %v1120
    %v1393 = vpack.c.b16 %v1125, %v1121
    %v1394 = vpack.c.b16 %v1126, %v1122
    %v1395 = vpack.c.b16 %v1131, %v1127
    %v1396 = vpack.c.b16 %v1132, %v1128
    %v1397 = vpack.c.b16 %v1133, %v1129
    %v1398 = vpack.c.b16 %v1134, %v1130
    %v1399 = vpack.c.b16 %v1139, %v1135
    %v1400 = vpack.c.b16 %v1140, %v1136
    %v1401 = vpack.c.b16 %v1141, %v1137
    %v1402 = vpack.c.b16 %v1142, %v1138
    %v1403 = vpack.c.b16 %v1147, %v1143
    %v1404 = vpack.c.b16 %v1148, %v1144
    %v1405 = vpack.c.b16 %v1149, %v1145
    %v1406 = vpack.c.b16 %v1150, %v1146
    %1663 = vmatprep.subr.bf16.mxu0 %v1180
    %1664 = vmatpush1.bf16.msra.mxu0 %v1179
    %1665 = vmatprep.subr.bf16.mxu0 %v1176
    %1666 = vmatpush1.bf16.msra.mxu0 %v1175
    %1667 = vmatprep.subr.bf16.mxu0 %v1172
    %1668 = vmatpush1.bf16.msra.mxu0 %v1171
    %1669 = vmatprep.subr.bf16.mxu0 %v1168
    %1670 = vmatpush1.bf16.msra.mxu0 %v1167
    %1671 = vmatprep.subr.bf16.mxu0 %v1164
    %1672 = vmatpush1.bf16.msra.mxu0 %v1163
    %1673 = vmatprep.subr.bf16.mxu0 %v1160
    %1674 = vmatpush1.bf16.msra.mxu0 %v1159
    %1675 = vmatprep.subr.bf16.mxu0 %v1156
    %1676 = vmatpush1.bf16.msra.mxu0 %v1155
    %1677 = vmatprep.subr.bf16.mxu0 %v1152
    %1678 = vmatpush1.bf16.msra.mxu0 %v1151
    %1679 = vmatprep.subr.bf16.mxu0 %v1212
    %1680 = vmatpush2.bf16.msra.mxu0 %v1211
    %1681 = vmatprep.subr.bf16.mxu0 %v1208
    %1682 = vmatpush2.bf16.msra.mxu0 %v1207
    %1683 = vmatprep.subr.bf16.mxu0 %v1204
    %1684 = vmatpush2.bf16.msra.mxu0 %v1203
    %1685 = vmatprep.subr.bf16.mxu0 %v1200
    %1686 = vmatpush2.bf16.msra.mxu0 %v1199
    %1687 = vmatprep.subr.bf16.mxu0 %v1196
    %1688 = vmatpush2.bf16.msra.mxu0 %v1195
    %1689 = vmatprep.subr.bf16.mxu0 %v1192
    %1690 = vmatpush2.bf16.msra.mxu0 %v1191
    %1691 = vmatprep.subr.bf16.mxu0 %v1188
    %1692 = vmatpush2.bf16.msra.mxu0 %v1187
    %1693 = vmatprep.subr.bf16.mxu0 %v1184
    %1694 = vmatpush2.bf16.msra.mxu0 %v1183
    %1695 = vmatprep.mubr.bf16.mxu0 %v368
    %1696 = vmatmul.mubr.bf16.gmra.mxu0 %v367
    %v1697 = vpop.f32.mrf.mxu0
    %v1698 = vadd.f32 %v338, %v1697
    %v1699 = vpop.f32.mrf.mxu0
    %v1700 = vadd.f32 %v342, %v1699
    %v1701 = vpop.f32.mrf.mxu0
    %v1702 = vpop.f32.mrf.mxu0
    %1703 = vdwg.mxu0
    %1704 = vmatprep.subr.bf16.mxu0 %v1244
    %1705 = vmatpush1.bf16.msra.mxu0 %v1243
    %1706 = vmatprep.subr.bf16.mxu0 %v1240
    %1707 = vmatpush1.bf16.msra.mxu0 %v1239
    %1708 = vmatprep.subr.bf16.mxu0 %v1236
    %1709 = vmatpush1.bf16.msra.mxu0 %v1235
    %1710 = vmatprep.subr.bf16.mxu0 %v1232
    %1711 = vmatpush1.bf16.msra.mxu0 %v1231
    %1712 = vmatprep.subr.bf16.mxu0 %v1228
    %1713 = vmatpush1.bf16.msra.mxu0 %v1227
    %1714 = vmatprep.subr.bf16.mxu0 %v1224
    %1715 = vmatpush1.bf16.msra.mxu0 %v1223
    %1716 = vmatprep.subr.bf16.mxu0 %v1220
    %1717 = vmatpush1.bf16.msra.mxu0 %v1219
    %1718 = vmatprep.subr.bf16.mxu0 %v1216
    %1719 = vmatpush1.bf16.msra.mxu0 %v1215
    %1720 = vmatprep.subr.bf16.mxu0 %v1276
    %1721 = vmatpush2.bf16.msra.mxu0 %v1275
    %1722 = vmatprep.subr.bf16.mxu0 %v1272
    %1723 = vmatpush2.bf16.msra.mxu0 %v1271
    %1724 = vmatprep.subr.bf16.mxu0 %v1268
    %1725 = vmatpush2.bf16.msra.mxu0 %v1267
    %1726 = vmatprep.subr.bf16.mxu0 %v1264
    %1727 = vmatpush2.bf16.msra.mxu0 %v1263
    %1728 = vmatprep.subr.bf16.mxu0 %v1260
    %1729 = vmatpush2.bf16.msra.mxu0 %v1259
    %1730 = vmatprep.subr.bf16.mxu0 %v1256
    %1731 = vmatpush2.bf16.msra.mxu0 %v1255
    %1732 = vmatprep.subr.bf16.mxu0 %v1252
    %1733 = vmatpush2.bf16.msra.mxu0 %v1251
    %1734 = vmatprep.subr.bf16.mxu0 %v1248
    %1735 = vmatpush2.bf16.msra.mxu0 %v1247
    %1736 = vmatprep.mubr.bf16.mxu0 %v370
    %1737 = vmatmul.mubr.bf16.gmra.mxu0 %v369
    %v1738 = vpop.f32.mrf.mxu0
    %v1739 = vadd.f32 %v1698, %v1738
    %v1740 = vpop.f32.mrf.mxu0
    %v1741 = vadd.f32 %v1700, %v1740
    %v1742 = vpop.f32.mrf.mxu0
    %v1743 = vpop.f32.mrf.mxu0
    %1744 = vdwg.mxu0
    %1745 = vmatprep.subr.bf16.mxu0 %v1308
    %1746 = vmatpush1.bf16.msra.mxu0 %v1307
    %1747 = vmatprep.subr.bf16.mxu0 %v1304
    %1748 = vmatpush1.bf16.msra.mxu0 %v1303
    %1749 = vmatprep.subr.bf16.mxu0 %v1300
    %1750 = vmatpush1.bf16.msra.mxu0 %v1299
    %1751 = vmatprep.subr.bf16.mxu0 %v1296
    %1752 = vmatpush1.bf16.msra.mxu0 %v1295
    %1753 = vmatprep.subr.bf16.mxu0 %v1292
    %1754 = vmatpush1.bf16.msra.mxu0 %v1291
    %1755 = vmatprep.subr.bf16.mxu0 %v1288
    %1756 = vmatpush1.bf16.msra.mxu0 %v1287
    %1757 = vmatprep.subr.bf16.mxu0 %v1284
    %1758 = vmatpush1.bf16.msra.mxu0 %v1283
    %1759 = vmatprep.subr.bf16.mxu0 %v1280
    %1760 = vmatpush1.bf16.msra.mxu0 %v1279
    %1761 = vmatprep.subr.bf16.mxu0 %v1340
    %1762 = vmatpush2.bf16.msra.mxu0 %v1339
    %1763 = vmatprep.subr.bf16.mxu0 %v1336
    %1764 = vmatpush2.bf16.msra.mxu0 %v1335
    %1765 = vmatprep.subr.bf16.mxu0 %v1332
    %1766 = vmatpush2.bf16.msra.mxu0 %v1331
    %1767 = vmatprep.subr.bf16.mxu0 %v1328
    %1768 = vmatpush2.bf16.msra.mxu0 %v1327
    %1769 = vmatprep.subr.bf16.mxu0 %v1324
    %1770 = vmatpush2.bf16.msra.mxu0 %v1323
    %1771 = vmatprep.subr.bf16.mxu0 %v1320
    %1772 = vmatpush2.bf16.msra.mxu0 %v1319
    %1773 = vmatprep.subr.bf16.mxu0 %v1316
    %1774 = vmatpush2.bf16.msra.mxu0 %v1315
    %1775 = vmatprep.subr.bf16.mxu0 %v1312
    %1776 = vmatpush2.bf16.msra.mxu0 %v1311
    %1777 = vmatprep.mubr.bf16.mxu0 %v372
    %1778 = vmatmul.mubr.bf16.gmra.mxu0 %v371
    %v1779 = vpop.f32.mrf.mxu0
    %v1780 = vadd.f32 %v1739, %v1779
    %v1781 = vpop.f32.mrf.mxu0
    %v1782 = vadd.f32 %v1741, %v1781
    %v1783 = vpop.f32.mrf.mxu0
    %v1784 = vpop.f32.mrf.mxu0
    %1785 = vdwg.mxu0
    %1786 = vmatprep.subr.bf16.mxu0 %v1372
    %1787 = vmatpush1.bf16.msra.mxu0 %v1371
    %1788 = vmatprep.subr.bf16.mxu0 %v1368
    %1789 = vmatpush1.bf16.msra.mxu0 %v1367
    %1790 = vmatprep.subr.bf16.mxu0 %v1364
    %1791 = vmatpush1.bf16.msra.mxu0 %v1363
    %1792 = vmatprep.subr.bf16.mxu0 %v1360
    %1793 = vmatpush1.bf16.msra.mxu0 %v1359
    %1794 = vmatprep.subr.bf16.mxu0 %v1356
    %1795 = vmatpush1.bf16.msra.mxu0 %v1355
    %1796 = vmatprep.subr.bf16.mxu0 %v1352
    %1797 = vmatpush1.bf16.msra.mxu0 %v1351
    %1798 = vmatprep.subr.bf16.mxu0 %v1348
    %1799 = vmatpush1.bf16.msra.mxu0 %v1347
    %1800 = vmatprep.subr.bf16.mxu0 %v1344
    %1801 = vmatpush1.bf16.msra.mxu0 %v1343
    %1802 = vmatprep.subr.bf16.mxu0 %v1404
    %1803 = vmatpush2.bf16.msra.mxu0 %v1403
    %1804 = vmatprep.subr.bf16.mxu0 %v1400
    %1805 = vmatpush2.bf16.msra.mxu0 %v1399
    %1806 = vmatprep.subr.bf16.mxu0 %v1396
    %1807 = vmatpush2.bf16.msra.mxu0 %v1395
    %1808 = vmatprep.subr.bf16.mxu0 %v1392
    %1809 = vmatpush2.bf16.msra.mxu0 %v1391
    %1810 = vmatprep.subr.bf16.mxu0 %v1388
    %1811 = vmatpush2.bf16.msra.mxu0 %v1387
    %1812 = vmatprep.subr.bf16.mxu0 %v1384
    %1813 = vmatpush2.bf16.msra.mxu0 %v1383
    %1814 = vmatprep.subr.bf16.mxu0 %v1380
    %1815 = vmatpush2.bf16.msra.mxu0 %v1379
    %1816 = vmatprep.subr.bf16.mxu0 %v1376
    %1817 = vmatpush2.bf16.msra.mxu0 %v1375
    %1818 = vmatprep.mubr.bf16.mxu0 %v374
    %1819 = vmatmul.mubr.bf16.gmra.mxu0 %v373
    %v1820 = vpop.f32.mrf.mxu0
    %v1821 = vadd.f32 %v1780, %v1820
    %v1822 = vpop.f32.mrf.mxu0
    %v1823 = vadd.f32 %v1782, %v1822
    %v1824 = vpop.f32.mrf.mxu0
    %v1825 = vpop.f32.mrf.mxu0
    %1826 = vdwg.mxu0
    %1827 = vmatprep.subr.bf16.mxu0 %v1182
    %1828 = vmatpush1.bf16.msra.mxu0 %v1181
    %1829 = vmatprep.subr.bf16.mxu0 %v1178
    %1830 = vmatpush1.bf16.msra.mxu0 %v1177
    %1831 = vmatprep.subr.bf16.mxu0 %v1174
    %1832 = vmatpush1.bf16.msra.mxu0 %v1173
    %1833 = vmatprep.subr.bf16.mxu0 %v1170
    %1834 = vmatpush1.bf16.msra.mxu0 %v1169
    %1835 = vmatprep.subr.bf16.mxu0 %v1166
    %1836 = vmatpush1.bf16.msra.mxu0 %v1165
    %1837 = vmatprep.subr.bf16.mxu0 %v1162
    %1838 = vmatpush1.bf16.msra.mxu0 %v1161
    %1839 = vmatprep.subr.bf16.mxu0 %v1158
    %1840 = vmatpush1.bf16.msra.mxu0 %v1157
    %1841 = vmatprep.subr.bf16.mxu0 %v1154
    %1842 = vmatpush1.bf16.msra.mxu0 %v1153
    %1843 = vmatprep.subr.bf16.mxu0 %v1214
    %1844 = vmatpush2.bf16.msra.mxu0 %v1213
    %1845 = vmatprep.subr.bf16.mxu0 %v1210
    %1846 = vmatpush2.bf16.msra.mxu0 %v1209
    %1847 = vmatprep.subr.bf16.mxu0 %v1206
    %1848 = vmatpush2.bf16.msra.mxu0 %v1205
    %1849 = vmatprep.subr.bf16.mxu0 %v1202
    %1850 = vmatpush2.bf16.msra.mxu0 %v1201
    %1851 = vmatprep.subr.bf16.mxu0 %v1198
    %1852 = vmatpush2.bf16.msra.mxu0 %v1197
    %1853 = vmatprep.subr.bf16.mxu0 %v1194
    %1854 = vmatpush2.bf16.msra.mxu0 %v1193
    %1855 = vmatprep.subr.bf16.mxu0 %v1190
    %1856 = vmatpush2.bf16.msra.mxu0 %v1189
    %1857 = vmatprep.subr.bf16.mxu0 %v1186
    %1858 = vmatpush2.bf16.msra.mxu0 %v1185
    %1859 = vmatprep.mubr.bf16.mxu0 %v368
    %1860 = vmatmul.mubr.bf16.gmra.mxu0 %v367
    %v1861 = vpop.f32.mrf.mxu0
    %v1862 = vadd.f32 %v346, %v1861
    %v1863 = vpop.f32.mrf.mxu0
    %v1864 = vadd.f32 %v350, %v1863
    %v1865 = vpop.f32.mrf.mxu0
    %v1866 = vpop.f32.mrf.mxu0
    %1867 = vdwg.mxu0
    %1868 = vmatprep.subr.bf16.mxu0 %v1246
    %1869 = vmatpush1.bf16.msra.mxu0 %v1245
    %1870 = vmatprep.subr.bf16.mxu0 %v1242
    %1871 = vmatpush1.bf16.msra.mxu0 %v1241
    %1872 = vmatprep.subr.bf16.mxu0 %v1238
    %1873 = vmatpush1.bf16.msra.mxu0 %v1237
    %1874 = vmatprep.subr.bf16.mxu0 %v1234
    %1875 = vmatpush1.bf16.msra.mxu0 %v1233
    %1876 = vmatprep.subr.bf16.mxu0 %v1230
    %1877 = vmatpush1.bf16.msra.mxu0 %v1229
    %1878 = vmatprep.subr.bf16.mxu0 %v1226
    %1879 = vmatpush1.bf16.msra.mxu0 %v1225
    %1880 = vmatprep.subr.bf16.mxu0 %v1222
    %1881 = vmatpush1.bf16.msra.mxu0 %v1221
    %1882 = vmatprep.subr.bf16.mxu0 %v1218
    %1883 = vmatpush1.bf16.msra.mxu0 %v1217
    %1884 = vmatprep.subr.bf16.mxu0 %v1278
    %1885 = vmatpush2.bf16.msra.mxu0 %v1277
    %1886 = vmatprep.subr.bf16.mxu0 %v1274
    %1887 = vmatpush2.bf16.msra.mxu0 %v1273
    %1888 = vmatprep.subr.bf16.mxu0 %v1270
    %1889 = vmatpush2.bf16.msra.mxu0 %v1269
    %1890 = vmatprep.subr.bf16.mxu0 %v1266
    %1891 = vmatpush2.bf16.msra.mxu0 %v1265
    %1892 = vmatprep.subr.bf16.mxu0 %v1262
    %1893 = vmatpush2.bf16.msra.mxu0 %v1261
    %1894 = vmatprep.subr.bf16.mxu0 %v1258
    %1895 = vmatpush2.bf16.msra.mxu0 %v1257
    %1896 = vmatprep.subr.bf16.mxu0 %v1254
    %1897 = vmatpush2.bf16.msra.mxu0 %v1253
    %1898 = vmatprep.subr.bf16.mxu0 %v1250
    %1899 = vmatpush2.bf16.msra.mxu0 %v1249
    %1900 = vmatprep.mubr.bf16.mxu0 %v370
    %1901 = vmatmul.mubr.bf16.gmra.mxu0 %v369
    %v1902 = vpop.f32.mrf.mxu0
    %v1903 = vadd.f32 %v1862, %v1902
    %v1904 = vpop.f32.mrf.mxu0
    %v1905 = vadd.f32 %v1864, %v1904
    %v1906 = vpop.f32.mrf.mxu0
    %v1907 = vpop.f32.mrf.mxu0
    %1908 = vdwg.mxu0
    %1909 = vmatprep.subr.bf16.mxu0 %v1310
    %1910 = vmatpush1.bf16.msra.mxu0 %v1309
    %1911 = vmatprep.subr.bf16.mxu0 %v1306
    %1912 = vmatpush1.bf16.msra.mxu0 %v1305
    %1913 = vmatprep.subr.bf16.mxu0 %v1302
    %1914 = vmatpush1.bf16.msra.mxu0 %v1301
    %1915 = vmatprep.subr.bf16.mxu0 %v1298
    %1916 = vmatpush1.bf16.msra.mxu0 %v1297
    %1917 = vmatprep.subr.bf16.mxu0 %v1294
    %1918 = vmatpush1.bf16.msra.mxu0 %v1293
    %1919 = vmatprep.subr.bf16.mxu0 %v1290
    %1920 = vmatpush1.bf16.msra.mxu0 %v1289
    %1921 = vmatprep.subr.bf16.mxu0 %v1286
    %1922 = vmatpush1.bf16.msra.mxu0 %v1285
    %1923 = vmatprep.subr.bf16.mxu0 %v1282
    %1924 = vmatpush1.bf16.msra.mxu0 %v1281
    %1925 = vmatprep.subr.bf16.mxu0 %v1342
    %1926 = vmatpush2.bf16.msra.mxu0 %v1341
    %1927 = vmatprep.subr.bf16.mxu0 %v1338
    %1928 = vmatpush2.bf16.msra.mxu0 %v1337
    %1929 = vmatprep.subr.bf16.mxu0 %v1334
    %1930 = vmatpush2.bf16.msra.mxu0 %v1333
    %1931 = vmatprep.subr.bf16.mxu0 %v1330
    %1932 = vmatpush2.bf16.msra.mxu0 %v1329
    %1933 = vmatprep.subr.bf16.mxu0 %v1326
    %1934 = vmatpush2.bf16.msra.mxu0 %v1325
    %1935 = vmatprep.subr.bf16.mxu0 %v1322
    %1936 = vmatpush2.bf16.msra.mxu0 %v1321
    %1937 = vmatprep.subr.bf16.mxu0 %v1318
    %1938 = vmatpush2.bf16.msra.mxu0 %v1317
    %1939 = vmatprep.subr.bf16.mxu0 %v1314
    %1940 = vmatpush2.bf16.msra.mxu0 %v1313
    %1941 = vmatprep.mubr.bf16.mxu0 %v372
    %1942 = vmatmul.mubr.bf16.gmra.mxu0 %v371
    %v1943 = vpop.f32.mrf.mxu0
    %v1944 = vadd.f32 %v1903, %v1943
    %v1945 = vpop.f32.mrf.mxu0
    %v1946 = vadd.f32 %v1905, %v1945
    %v1947 = vpop.f32.mrf.mxu0
    %v1948 = vpop.f32.mrf.mxu0
    %1949 = vdwg.mxu0
    %1950 = vmatprep.subr.bf16.mxu0 %v1374
    %1951 = vmatpush1.bf16.msra.mxu0 %v1373
    %1952 = vmatprep.subr.bf16.mxu0 %v1370
    %1953 = vmatpush1.bf16.msra.mxu0 %v1369
    %1954 = vmatprep.subr.bf16.mxu0 %v1366
    %1955 = vmatpush1.bf16.msra.mxu0 %v1365
    %1956 = vmatprep.subr.bf16.mxu0 %v1362
    %1957 = vmatpush1.bf16.msra.mxu0 %v1361
    %1958 = vmatprep.subr.bf16.mxu0 %v1358
    %1959 = vmatpush1.bf16.msra.mxu0 %v1357
    %1960 = vmatprep.subr.bf16.mxu0 %v1354
    %1961 = vmatpush1.bf16.msra.mxu0 %v1353
    %1962 = vmatprep.subr.bf16.mxu0 %v1350
    %1963 = vmatpush1.bf16.msra.mxu0 %v1349
    %1964 = vmatprep.subr.bf16.mxu0 %v1346
    %1965 = vmatpush1.bf16.msra.mxu0 %v1345
    %1966 = vmatprep.subr.bf16.mxu0 %v1406
    %1967 = vmatpush2.bf16.msra.mxu0 %v1405
    %1968 = vmatprep.subr.bf16.mxu0 %v1402
    %1969 = vmatpush2.bf16.msra.mxu0 %v1401
    %1970 = vmatprep.subr.bf16.mxu0 %v1398
    %1971 = vmatpush2.bf16.msra.mxu0 %v1397
    %1972 = vmatprep.subr.bf16.mxu0 %v1394
    %1973 = vmatpush2.bf16.msra.mxu0 %v1393
    %1974 = vmatprep.subr.bf16.mxu0 %v1390
    %1975 = vmatpush2.bf16.msra.mxu0 %v1389
    %1976 = vmatprep.subr.bf16.mxu0 %v1386
    %1977 = vmatpush2.bf16.msra.mxu0 %v1385
    %1978 = vmatprep.subr.bf16.mxu0 %v1382
    %1979 = vmatpush2.bf16.msra.mxu0 %v1381
    %1980 = vmatprep.subr.bf16.mxu0 %v1378
    %1981 = vmatpush2.bf16.msra.mxu0 %v1377
    %1982 = vmatprep.mubr.bf16.mxu0 %v374
    %1983 = vmatmul.mubr.bf16.gmra.mxu0 %v373
    %v1984 = vpop.f32.mrf.mxu0
    %v1985 = vadd.f32 %v1944, %v1984
    %v1986 = vpop.f32.mrf.mxu0
    %v1987 = vadd.f32 %v1946, %v1986
    %v1988 = vpop.f32.mrf.mxu0
    %v1989 = vpop.f32.mrf.mxu0
    %1990 = vdwg.mxu0
    %v1991 = vmax.f32 %v1821, 0.0
    %v1992 = vmax.f32 %v1823, 0.0
    %v1993 = vmax.f32 %v1985, 0.0
    %v1994 = vmax.f32 %v1987, 0.0
    %v1995 = vpack.c.bf16 %v1991, %v1991
    %v1996 = vpack.c.bf16 %v1992, %v1992
    %v1997 = vpack.c.bf16 %v1993, %v1993
    %v1998 = vpack.c.bf16 %v1994, %v1994
    %v1999 = vld [vmem:[#allocation8] sm:$0xf]
    %v2000 = vld [vmem:[#allocation8 + $0x4] sm:$0xf]
    %v2001 = vld [vmem:[#allocation8 + $0x8] sm:$0xf]
    %v2002 = vld [vmem:[#allocation8 + $0xc] sm:$0xf]
    %v2003 = vld [vmem:[#allocation8 + $0x10] sm:$0xf]
    %v2004 = vld [vmem:[#allocation8 + $0x14] sm:$0xf]
    %v2005 = vld [vmem:[#allocation8 + $0x18] sm:$0xf]
    %v2006 = vld [vmem:[#allocation8 + $0x1c] sm:$0xf]
    %v2007 = vld [vmem:[#allocation8 + $0x20] sm:$0xf]
    %v2008 = vld [vmem:[#allocation8 + $0x24] sm:$0xf]
    %v2009 = vld [vmem:[#allocation8 + $0x28] sm:$0xf]
    %v2010 = vld [vmem:[#allocation8 + $0x2c] sm:$0xf]
    %v2011 = vld [vmem:[#allocation8 + $0x30] sm:$0xf]
    %v2012 = vld [vmem:[#allocation8 + $0x34] sm:$0xf]
    %v2013 = vld [vmem:[#allocation8 + $0x38] sm:$0xf]
    %v2014 = vld [vmem:[#allocation8 + $0x3c] sm:$0xf]
    %v2015 = vld [vmem:[#allocation8 + $0x40] sm:$0xf]
    %v2016 = vld [vmem:[#allocation8 + $0x44] sm:$0xf]
    %v2017 = vld [vmem:[#allocation8 + $0x48] sm:$0xf]
    %v2018 = vld [vmem:[#allocation8 + $0x4c] sm:$0xf]
    %v2019 = vld [vmem:[#allocation8 + $0x50] sm:$0xf]
    %v2020 = vld [vmem:[#allocation8 + $0x54] sm:$0xf]
    %v2021 = vld [vmem:[#allocation8 + $0x58] sm:$0xf]
    %v2022 = vld [vmem:[#allocation8 + $0x5c] sm:$0xf]
    %v2023 = vld [vmem:[#allocation8 + $0x60] sm:$0xf]
    %v2024 = vld [vmem:[#allocation8 + $0x64] sm:$0xf]
    %v2025 = vld [vmem:[#allocation8 + $0x68] sm:$0xf]
    %v2026 = vld [vmem:[#allocation8 + $0x6c] sm:$0xf]
    %v2027 = vld [vmem:[#allocation8 + $0x70] sm:$0xf]
    %v2028 = vld [vmem:[#allocation8 + $0x74] sm:$0xf]
    %v2029 = vld [vmem:[#allocation8 + $0x78] sm:$0xf]
    %v2030 = vld [vmem:[#allocation8 + $0x7c] sm:$0xf]
    %v2031 = vld [vmem:[#allocation8 + $0x80] sm:$0xf]
    %v2032 = vld [vmem:[#allocation8 + $0x84] sm:$0xf]
    %v2033 = vld [vmem:[#allocation8 + $0x88] sm:$0xf]
    %v2034 = vld [vmem:[#allocation8 + $0x8c] sm:$0xf]
    %v2035 = vld [vmem:[#allocation8 + $0x90] sm:$0xf]
    %v2036 = vld [vmem:[#allocation8 + $0x94] sm:$0xf]
    %v2037 = vld [vmem:[#allocation8 + $0x98] sm:$0xf]
    %v2038 = vld [vmem:[#allocation8 + $0x9c] sm:$0xf]
    %v2039 = vld [vmem:[#allocation8 + $0xa0] sm:$0xf]
    %v2040 = vld [vmem:[#allocation8 + $0xa4] sm:$0xf]
    %v2041 = vld [vmem:[#allocation8 + $0xa8] sm:$0xf]
    %v2042 = vld [vmem:[#allocation8 + $0xac] sm:$0xf]
    %v2043 = vld [vmem:[#allocation8 + $0xb0] sm:$0xf]
    %v2044 = vld [vmem:[#allocation8 + $0xb4] sm:$0xf]
    %v2045 = vld [vmem:[#allocation8 + $0xb8] sm:$0xf]
    %v2046 = vld [vmem:[#allocation8 + $0xbc] sm:$0xf]
    %v2047 = vld [vmem:[#allocation8 + $0xc0] sm:$0xf]
    %v2048 = vld [vmem:[#allocation8 + $0xc4] sm:$0xf]
    %v2049 = vld [vmem:[#allocation8 + $0xc8] sm:$0xf]
    %v2050 = vld [vmem:[#allocation8 + $0xcc] sm:$0xf]
    %v2051 = vld [vmem:[#allocation8 + $0xd0] sm:$0xf]
    %v2052 = vld [vmem:[#allocation8 + $0xd4] sm:$0xf]
    %v2053 = vld [vmem:[#allocation8 + $0xd8] sm:$0xf]
    %v2054 = vld [vmem:[#allocation8 + $0xdc] sm:$0xf]
    %v2055 = vld [vmem:[#allocation8 + $0xe0] sm:$0xf]
    %v2056 = vld [vmem:[#allocation8 + $0xe4] sm:$0xf]
    %v2057 = vld [vmem:[#allocation8 + $0xe8] sm:$0xf]
    %v2058 = vld [vmem:[#allocation8 + $0xec] sm:$0xf]
    %v2059 = vld [vmem:[#allocation8 + $0xf0] sm:$0xf]
    %v2060 = vld [vmem:[#allocation8 + $0xf4] sm:$0xf]
    %v2061 = vld [vmem:[#allocation8 + $0xf8] sm:$0xf]
    %v2062 = vld [vmem:[#allocation8 + $0xfc] sm:$0xf]
    %v2063 = vld [vmem:[%s4] sm:$0x1]
    %v2065 = vlaneseq
    %v2066 = vshrl.u32 %v2065, 7
    %v2067 = vsub.s32 0, %v2066
    %v2068 = vrot.slane %v2063, %v2067
    %v2134 = vunpack.c.l.b16 %v1999
    %v2135 = vunpack.c.l.b16 %v2000
    %v2136 = vunpack.c.l.b16 %v2001
    %v2137 = vunpack.c.l.b16 %v2002
    %v2138 = vunpack.c.l.b16 %v2003
    %v2139 = vunpack.c.l.b16 %v2004
    %v2140 = vunpack.c.l.b16 %v2005
    %v2141 = vunpack.c.l.b16 %v2006
    %v2142 = vunpack.c.l.b16 %v2007
    %v2143 = vunpack.c.l.b16 %v2008
    %v2144 = vunpack.c.l.b16 %v2009
    %v2145 = vunpack.c.l.b16 %v2010
    %v2146 = vunpack.c.l.b16 %v2011
    %v2147 = vunpack.c.l.b16 %v2012
    %v2148 = vunpack.c.l.b16 %v2013
    %v2149 = vunpack.c.l.b16 %v2014
    %v2150 = vunpack.c.l.b16 %v2015
    %v2151 = vunpack.c.l.b16 %v2016
    %v2152 = vunpack.c.l.b16 %v2017
    %v2153 = vunpack.c.l.b16 %v2018
    %v2154 = vunpack.c.l.b16 %v2019
    %v2155 = vunpack.c.l.b16 %v2020
    %v2156 = vunpack.c.l.b16 %v2021
    %v2157 = vunpack.c.l.b16 %v2022
    %v2158 = vunpack.c.l.b16 %v2023
    %v2159 = vunpack.c.l.b16 %v2024
    %v2160 = vunpack.c.l.b16 %v2025
    %v2161 = vunpack.c.l.b16 %v2026
    %v2162 = vunpack.c.l.b16 %v2027
    %v2163 = vunpack.c.l.b16 %v2028
    %v2164 = vunpack.c.l.b16 %v2029
    %v2165 = vunpack.c.l.b16 %v2030
    %v2166 = vunpack.c.l.b16 %v2031
    %v2167 = vunpack.c.l.b16 %v2032
    %v2168 = vunpack.c.l.b16 %v2033
    %v2169 = vunpack.c.l.b16 %v2034
    %v2170 = vunpack.c.l.b16 %v2035
    %v2171 = vunpack.c.l.b16 %v2036
    %v2172 = vunpack.c.l.b16 %v2037
    %v2173 = vunpack.c.l.b16 %v2038
    %v2174 = vunpack.c.l.b16 %v2039
    %v2175 = vunpack.c.l.b16 %v2040
    %v2176 = vunpack.c.l.b16 %v2041
    %v2177 = vunpack.c.l.b16 %v2042
    %v2178 = vunpack.c.l.b16 %v2043
    %v2179 = vunpack.c.l.b16 %v2044
    %v2180 = vunpack.c.l.b16 %v2045
    %v2181 = vunpack.c.l.b16 %v2046
    %v2182 = vunpack.c.l.b16 %v2047
    %v2183 = vunpack.c.l.b16 %v2048
    %v2184 = vunpack.c.l.b16 %v2049
    %v2185 = vunpack.c.l.b16 %v2050
    %v2186 = vunpack.c.l.b16 %v2051
    %v2187 = vunpack.c.l.b16 %v2052
    %v2188 = vunpack.c.l.b16 %v2053
    %v2189 = vunpack.c.l.b16 %v2054
    %v2190 = vunpack.c.l.b16 %v2055
    %v2191 = vunpack.c.l.b16 %v2056
    %v2192 = vunpack.c.l.b16 %v2057
    %v2193 = vunpack.c.l.b16 %v2058
    %v2194 = vunpack.c.l.b16 %v2059
    %v2195 = vunpack.c.l.b16 %v2060
    %v2196 = vunpack.c.l.b16 %v2061
    %v2197 = vunpack.c.l.b16 %v2062
    %v2198 = vpack.c.b16 %v2135, %v2134
    %v2199 = vpack.c.b16 %v2137, %v2136
    %v2200 = vpack.c.b16 %v2139, %v2138
    %v2201 = vpack.c.b16 %v2141, %v2140
    %v2202 = vpack.c.b16 %v2143, %v2142
    %v2203 = vpack.c.b16 %v2145, %v2144
    %v2204 = vpack.c.b16 %v2147, %v2146
    %v2205 = vpack.c.b16 %v2149, %v2148
    %v2206 = vpack.c.b16 %v2151, %v2150
    %v2207 = vpack.c.b16 %v2153, %v2152
    %v2208 = vpack.c.b16 %v2155, %v2154
    %v2209 = vpack.c.b16 %v2157, %v2156
    %v2210 = vpack.c.b16 %v2159, %v2158
    %v2211 = vpack.c.b16 %v2161, %v2160
    %v2212 = vpack.c.b16 %v2163, %v2162
    %v2213 = vpack.c.b16 %v2165, %v2164
    %v2214 = vpack.c.b16 %v2167, %v2166
    %v2215 = vpack.c.b16 %v2169, %v2168
    %v2216 = vpack.c.b16 %v2171, %v2170
    %v2217 = vpack.c.b16 %v2173, %v2172
    %v2218 = vpack.c.b16 %v2175, %v2174
    %v2219 = vpack.c.b16 %v2177, %v2176
    %v2220 = vpack.c.b16 %v2179, %v2178
    %v2221 = vpack.c.b16 %v2181, %v2180
    %v2222 = vpack.c.b16 %v2183, %v2182
    %v2223 = vpack.c.b16 %v2185, %v2184
    %v2224 = vpack.c.b16 %v2187, %v2186
    %v2225 = vpack.c.b16 %v2189, %v2188
    %v2226 = vpack.c.b16 %v2191, %v2190
    %v2227 = vpack.c.b16 %v2193, %v2192
    %v2228 = vpack.c.b16 %v2195, %v2194
    %v2229 = vpack.c.b16 %v2197, %v2196
    %2262 = vmatprep.subr.bf16.mxu0 0
    %2263 = vmatpush1.bf16.msra.mxu0 %v2205
    %2264 = vmatprep.subr.bf16.mxu0 0
    %2265 = vmatpush1.bf16.msra.mxu0 %v2204
    %2266 = vmatprep.subr.bf16.mxu0 0
    %2267 = vmatpush1.bf16.msra.mxu0 %v2203
    %2268 = vmatprep.subr.bf16.mxu0 0
    %2269 = vmatpush1.bf16.msra.mxu0 %v2202
    %2270 = vmatprep.subr.bf16.mxu0 0
    %2271 = vmatpush1.bf16.msra.mxu0 %v2201
    %2272 = vmatprep.subr.bf16.mxu0 0
    %2273 = vmatpush1.bf16.msra.mxu0 %v2200
    %2274 = vmatprep.subr.bf16.mxu0 0
    %2275 = vmatpush1.bf16.msra.mxu0 %v2199
    %2276 = vmatprep.subr.bf16.mxu0 0
    %2277 = vmatpush1.bf16.msra.mxu0 %v2198
    %2278 = vmatprep.subr.bf16.mxu0 0
    %2279 = vmatpush2.bf16.msra.mxu0 %v2213
    %2280 = vmatprep.subr.bf16.mxu0 0
    %2281 = vmatpush2.bf16.msra.mxu0 %v2212
    %2282 = vmatprep.subr.bf16.mxu0 0
    %2283 = vmatpush2.bf16.msra.mxu0 %v2211
    %2284 = vmatprep.subr.bf16.mxu0 0
    %2285 = vmatpush2.bf16.msra.mxu0 %v2210
    %2286 = vmatprep.subr.bf16.mxu0 0
    %2287 = vmatpush2.bf16.msra.mxu0 %v2209
    %2288 = vmatprep.subr.bf16.mxu0 0
    %2289 = vmatpush2.bf16.msra.mxu0 %v2208
    %2290 = vmatprep.subr.bf16.mxu0 0
    %2291 = vmatpush2.bf16.msra.mxu0 %v2207
    %2292 = vmatprep.subr.bf16.mxu0 0
    %2293 = vmatpush2.bf16.msra.mxu0 %v2206
    %2294 = vmatprep.mubr.bf16.mxu0 %v1996
    %2295 = vmatmul.mubr.bf16.gmra.mxu0 %v1995
    %v2296 = vpop.f32.mrf.mxu0
    %v2297 = vadd.f32 %v2068, %v2296
    %v2298 = vpop.f32.mrf.mxu0
    %v2299 = vpop.f32.mrf.mxu0
    %v2300 = vpop.f32.mrf.mxu0
    %2301 = vdwg.mxu0
    %2302 = vmatprep.subr.bf16.mxu0 0
    %2303 = vmatpush1.bf16.msra.mxu0 %v2221
    %2304 = vmatprep.subr.bf16.mxu0 0
    %2305 = vmatpush1.bf16.msra.mxu0 %v2220
    %2306 = vmatprep.subr.bf16.mxu0 0
    %2307 = vmatpush1.bf16.msra.mxu0 %v2219
    %2308 = vmatprep.subr.bf16.mxu0 0
    %2309 = vmatpush1.bf16.msra.mxu0 %v2218
    %2310 = vmatprep.subr.bf16.mxu0 0
    %2311 = vmatpush1.bf16.msra.mxu0 %v2217
    %2312 = vmatprep.subr.bf16.mxu0 0
    %2313 = vmatpush1.bf16.msra.mxu0 %v2216
    %2314 = vmatprep.subr.bf16.mxu0 0
    %2315 = vmatpush1.bf16.msra.mxu0 %v2215
    %2316 = vmatprep.subr.bf16.mxu0 0
    %2317 = vmatpush1.bf16.msra.mxu0 %v2214
    %2318 = vmatprep.subr.bf16.mxu0 0
    %2319 = vmatpush2.bf16.msra.mxu0 %v2229
    %2320 = vmatprep.subr.bf16.mxu0 0
    %2321 = vmatpush2.bf16.msra.mxu0 %v2228
    %2322 = vmatprep.subr.bf16.mxu0 0
    %2323 = vmatpush2.bf16.msra.mxu0 %v2227
    %2324 = vmatprep.subr.bf16.mxu0 0
    %2325 = vmatpush2.bf16.msra.mxu0 %v2226
    %2326 = vmatprep.subr.bf16.mxu0 0
    %2327 = vmatpush2.bf16.msra.mxu0 %v2225
    %2328 = vmatprep.subr.bf16.mxu0 0
    %2329 = vmatpush2.bf16.msra.mxu0 %v2224
    %2330 = vmatprep.subr.bf16.mxu0 0
    %2331 = vmatpush2.bf16.msra.mxu0 %v2223
    %2332 = vmatprep.subr.bf16.mxu0 0
    %2333 = vmatpush2.bf16.msra.mxu0 %v2222
    %2334 = vmatprep.mubr.bf16.mxu0 %v1998
    %2335 = vmatmul.mubr.bf16.gmra.mxu0 %v1997
    %v2336 = vpop.f32.mrf.mxu0
    %v2337 = vadd.f32 %v2297, %v2336
    %v2338 = vpop.f32.mrf.mxu0
    %v2339 = vpop.f32.mrf.mxu0
    %v2340 = vpop.f32.mrf.mxu0
    %2341 = vdwg.mxu0
    %2342 = vst [vmem:[#allocation10] sm:$0xff] %v2337
    // Predicated region
    $region38: #{tpu_custom_call.1} parent=1 // pred_check
      _
    $region39: #{tpu_custom_call.1} parent=1 // pred_check_branch
      %2344 = sbr.rel (0) target = $region41
    $region40: #{tpu_custom_call.1} parent=1 // pred_region
      %s2346 = ssub.s32 128, 128
      %2347 = vsyncadd [#allocation4], %s2346
      %s2349 = sshll.u32 [#allocation10], 4
      %s2350 = int_to_ptr.vmem [resolvable:$true] %s2349
      %2352 = dma.vmem_to_hbm [thread:$0]  %s2350, 128, %s5, [#allocation4]
    $region41: #{tpu_custom_call.1} parent=1 // pred_fallthru
      _
    // Predicated region
    $region42: #{tpu_custom_call.1} parent=1 // pred_check
      _
    $region43: #{tpu_custom_call.1} parent=1 // pred_check_branch
      %2354 = sbr.rel (0) target = $region45
    $region44: #{tpu_custom_call.1} parent=1 // pred_region
      %2355 = dma.done [#allocation4], 128
    $region45: #{tpu_custom_call.1} parent=1 // pred_fallthru
      _
    %2356 = vsyncpa [#allocation3], 1
    %2357 = vsyncpa [#allocation6], 1
    %2358 = vsyncpa [#allocation9], 1
    %2359 = vsyncpa [#allocation4], 1

</llo_original>
